<compile_context>
chip_gen: v7x
topology: tpu7x:2x2x1
jax: 0.10.0
libtpu: 0.0.40
codegen_flags: <defaults>
</compile_context>

<pallas_src>
import functools
import math

import jax
import jax.numpy as jnp
from jax import lax
from jax.experimental import pallas as pl
from jax.experimental.pallas import tpu as pltpu

EPS = 1e-5  # torch.nn.GroupNorm default


# ------------------------------- fused kernel ------------------------------- #

def _attn_block_kernel(x_full_ref, x_tile_ref, gmatT_ref, gmat_ref,
                       gamma_ref, beta_ref, wqkv_ref, bqkv_ref, wo_ref, bo_ref,
                       o_ref, q_seq_ref, kv_ref, *, tq):
    """grid = (batch, query_tile). Channel-major (C, L) layout.

    Scratch (persistent across the query-tile axis, re-initialised at j == 0):
      q_seq_ref : (L, C)  bf16  sequence-major Q (scale already folded in)
      kv_ref    : (2C, L) bf16  channel-major K (rows [0,C)) and V (rows [C,2C))
    """
    _, C, L = x_full_ref.shape
    G = gmatT_ref.shape[0]
    cg = C // G
    j = pl.program_id(1)

    # ---- once per batch element: GroupNorm stats + fused QKV projection ----
    @pl.when(j == 0)
    def _():
        x = x_full_ref[0]                                              # (C, L) f32
        inv_cnt = 1.0 / float(L * cg)
        # per-channel sums -> per-group stats via tiny one-hot matvecs (f32)
        s1 = jnp.sum(x, axis=1, keepdims=True)                         # (C, 1)
        mean_g = jnp.dot(gmatT_ref[...], s1,
                         preferred_element_type=jnp.float32) * inv_cnt  # (G, 1)
        mean_c = jnp.dot(gmat_ref[...], mean_g,
                         preferred_element_type=jnp.float32)            # (C, 1)
        xc = x - mean_c
        s2 = jnp.sum(xc * xc, axis=1, keepdims=True)                    # (C, 1)
        var_g = jnp.dot(gmatT_ref[...], s2,
                        preferred_element_type=jnp.float32) * inv_cnt   # (G, 1)
        inv_c = jnp.dot(gmat_ref[...], lax.rsqrt(var_g + EPS),
                        preferred_element_type=jnp.float32)             # (C, 1)
        xn = (xc * inv_c * gamma_ref[...] + beta_ref[...]).astype(jnp.bfloat16)

        # fused QKV: one (3C, C) @ (C, L) MXU pass, bf16 operands, f32 accumulation
        qkv = jnp.dot(wqkv_ref[...], xn,
                      preferred_element_type=jnp.float32) + bqkv_ref[...]   # (3C, L)
        q_seq_ref[...] = jnp.transpose(qkv[:C, :]).astype(q_seq_ref.dtype)  # (L, C)
        kv_ref[...] = qkv[C:, :].astype(kv_ref.dtype)                       # (2C, L)

    # ---- per query tile: attention + out projection + residual ----
    start = pl.multiple_of(j * tq, tq)
    q = q_seq_ref[pl.ds(start, tq), :]           # (tq, C) bf16, 1/sqrt(C) folded in
    k = kv_ref[pl.ds(0, C), :]                   # (C, L)  bf16
    v = kv_ref[pl.ds(C, C), :]                   # (C, L)  bf16

    scores = jnp.dot(q, k, preferred_element_type=jnp.float32)          # (tq, L) f32
    m = jnp.max(scores, axis=-1, keepdims=True)
    p = jnp.exp(scores - m)
    p = p * pl.reciprocal(jnp.sum(p, axis=-1, keepdims=True), approx=True)
    ctx = lax.dot_general(v, p.astype(jnp.bfloat16),                     # v @ p^T
                          (((1,), (1,)), ((), ())),
                          preferred_element_type=jnp.float32)            # (C, tq) f32

    out = jnp.dot(wo_ref[...], ctx.astype(jnp.bfloat16),
                  preferred_element_type=jnp.float32) + bo_ref[...]      # (C, tq)
    o_ref[0] = (out + x_tile_ref[0]).astype(o_ref.dtype)                 # + residual


# --------------------------------- wrapper ---------------------------------- #

def attention_block_forward(x_nchw, params, num_groups=32):
    B, C, H, W = x_nchw.shape
    L = H * W
    G = num_groups
    assert C % G == 0
    cg = C // G

    # NCHW -> (B, C, L) is a pure view (no transpose, no extra HBM traffic).
    x_bcl = x_nchw.reshape(B, C, L).astype(jnp.float32)

    # Query tile: lane-dense (>=128) when possible; fall back to L for small images.
    if L % 128 == 0:
        tq = 256 if (L % 256 == 0 and L >= 1024) else 128
    else:
        tq = L
    nq = L // tq

    # Fused QKV weight (3C, C); fold 1/sqrt(C) attention scale into the Q rows + bias.
    scale = 1.0 / math.sqrt(C)
    row_scale = jnp.concatenate([jnp.full((C,), scale, jnp.float32),
                                 jnp.ones((2 * C,), jnp.float32)])
    wqkv = (params["qkv_w"][:, :, 0] * row_scale[:, None]).astype(jnp.bfloat16)
    bqkv = (params["qkv_b"] * row_scale).reshape(3 * C, 1).astype(jnp.float32)
    wo = params["out_w"][:, :, 0].astype(jnp.bfloat16)        # (C_out, C_in), channel-major
    bo = params["out_b"].reshape(C, 1).astype(jnp.float32)

    # Group one-hot pooling matrices (tiny, constant, fetched once).
    ch = jnp.arange(C) // cg
    gmat = (ch[:, None] == jnp.arange(G)[None, :]).astype(jnp.float32)   # (C, G)
    gmatT = jnp.transpose(gmat)                                          # (G, C)

    kernel = functools.partial(_attn_block_kernel, tq=tq)

    out_bcl = pl.pallas_call(
        kernel,
        out_shape=jax.ShapeDtypeStruct((B, C, L), jnp.float32),
        grid=(B, nq),
        in_specs=[
            pl.BlockSpec((1, C, L), lambda b, j: (b, 0, 0)),    # full x (once per b)
            pl.BlockSpec((1, C, tq), lambda b, j: (b, 0, j)),   # residual tile
            pl.BlockSpec((G, C), lambda b, j: (0, 0)),          # gmatT
            pl.BlockSpec((C, G), lambda b, j: (0, 0)),          # gmat
            pl.BlockSpec((C, 1), lambda b, j: (0, 0)),          # gamma
            pl.BlockSpec((C, 1), lambda b, j: (0, 0)),          # beta
            pl.BlockSpec((3 * C, C), lambda b, j: (0, 0)),      # wqkv (bf16)
            pl.BlockSpec((3 * C, 1), lambda b, j: (0, 0)),      # bqkv
            pl.BlockSpec((C, C), lambda b, j: (0, 0)),          # wo (bf16)
            pl.BlockSpec((C, 1), lambda b, j: (0, 0)),          # bo
        ],
        out_specs=pl.BlockSpec((1, C, tq), lambda b, j: (b, 0, j)),
        scratch_shapes=[
            pltpu.VMEM((L, C), jnp.bfloat16),       # Q, sequence-major
            pltpu.VMEM((2 * C, L), jnp.bfloat16),   # K | V, channel-major
        ],
        compiler_params=pltpu.CompilerParams(
            dimension_semantics=("parallel", "arbitrary"),
            vmem_limit_bytes=64 * 1024 * 1024,
        ),
    )(x_bcl, x_bcl, gmatT, gmat,
      params["gn_g"].reshape(C, 1).astype(jnp.float32),
      params["gn_b"].reshape(C, 1).astype(jnp.float32),
      wqkv, bqkv, wo, bo)

    # (B, C, L) -> NCHW is again a pure view.
    return out_bcl.reshape(B, C, H, W)


# ----------------------------- pure-JAX reference ---------------------------- #

def _ref_forward(x_nchw, params, num_groups=32):
    B, C, H, W = x_nchw.shape
    L = H * W
    xi = x_nchw.reshape(B, C, L)

    G = num_groups
    xg = xi.reshape(B, G, C // G, L)
    m = xg.mean(axis=(2, 3), keepdims=True)
    v = ((xg - m) ** 2).mean(axis=(2, 3), keepdims=True)
    xn = ((xg - m) / jnp.sqrt(v + EPS)).reshape(B, C, L)
    xn = xn * params["gn_g"].reshape(1, C, 1) + params["gn_b"].reshape(1, C, 1)

    qkv = (jnp.einsum("oc,bcl->bol", params["qkv_w"][:, :, 0], xn)
           + params["qkv_b"].reshape(1, -1, 1))
    qkv = jnp.transpose(qkv, (0, 2, 1))                      # (B, L, 3C)
    q, k, vv = jnp.split(qkv, 3, axis=2)

    scale = 1.0 / math.sqrt(C)
    scores = jnp.einsum("bqc,bkc->bqk", q, k) * scale
    attn = jax.nn.softmax(scores, axis=-1)
    ctx = jnp.einsum("bqk,bkc->bqc", attn, vv)               # (B, L, C)
    ctx = jnp.transpose(ctx, (0, 2, 1))                      # (B, C, L)

    out = (jnp.einsum("oc,bcl->bol", params["out_w"][:, :, 0], ctx)
           + params["out_b"].reshape(1, -1, 1))
    out = out + xi
    return out.reshape(B, C, H, W)


# ----------------------------------- main ------------------------------------ #

if __name__ == "__main__":
    # GroupNorm(32, C) requires C % 32 == 0; smallest nontrivial grouping: C = 64.
    B, C, H, W = 2, 64, 8, 8

    key = jax.random.PRNGKey(0)
    ks = jax.random.split(key, 8)
    s = 0.1
    params = {
        "gn_g": 1.0 + s * jax.random.normal(ks[0], (C,), jnp.float32),
        "gn_b": s * jax.random.normal(ks[1], (C,), jnp.float32),
        # Conv1d(C, 3C, 1) weight: (3C, C, 1); Conv1d(C, C, 1) weight: (C, C, 1)
        "qkv_w": s * jax.random.normal(ks[2], (3 * C, C, 1), jnp.float32),
        "qkv_b": s * jax.random.normal(ks[3], (3 * C,), jnp.float32),
        "out_w": s * jax.random.normal(ks[4], (C, C, 1), jnp.float32),
        "out_b": s * jax.random.normal(ks[5], (C,), jnp.float32),
    }

    x = jax.random.normal(ks[6], (B, C, H, W), jnp.float32)   # NCHW like PyTorch

    out = jax.block_until_ready(attention_block_forward(x, params))
    ref = jax.block_until_ready(_ref_forward(x, params))

    assert out.shape == (B, C, H, W), out.shape
    err = float(jnp.max(jnp.abs(out - ref)))
    # bf16 MXU operands + approx reciprocal vs f32 reference -> loosened tolerance.
    assert jnp.allclose(out, ref, rtol=2.5e-2, atol=2.5e-2), err
    print("KERNEL_OK")
</pallas_src>

<mosaic_0001>
module attributes {stable_mosaic.version = 11 : i64} {
  func.func @_attn_block_kernel(%arg0: i32, %arg1: i32, %arg2: memref<1x64x64xf32, #tpu.memory_space<vmem>>, %arg3: memref<1x64x64xf32, #tpu.memory_space<vmem>>, %arg4: memref<32x64xf32, #tpu.memory_space<vmem>>, %arg5: memref<64x32xf32, #tpu.memory_space<vmem>>, %arg6: memref<64x1xf32, #tpu.memory_space<vmem>>, %arg7: memref<64x1xf32, #tpu.memory_space<vmem>>, %arg8: memref<192x64xbf16, #tpu.memory_space<vmem>>, %arg9: memref<192x1xf32, #tpu.memory_space<vmem>>, %arg10: memref<64x64xbf16, #tpu.memory_space<vmem>>, %arg11: memref<64x1xf32, #tpu.memory_space<vmem>>, %arg12: memref<1x64x64xf32, #tpu.memory_space<vmem>>, %arg13: memref<64x64xbf16, #tpu.memory_space<vmem>>, %arg14: memref<128x64xbf16, #tpu.memory_space<vmem>>) attributes {dimension_semantics = [#tpu.dimension_semantics<parallel>, #tpu.dimension_semantics<arbitrary>], iteration_bounds = array<i64: 2, 1>, scalar_prefetch = 0 : i64, scratch_operands = 2 : i64, tpu.core_type = #tpu.core_type<tc>, window_params = [{transform_indices = @transform_0, window_bounds = array<i64: 1, 64, 64>}, {transform_indices = @transform_1, window_bounds = array<i64: 1, 64, 64>}, {pipeline_mode = #tpu.pipeline_mode<synchronous>, transform_indices = @transform_2, window_bounds = array<i64: 32, 64>}, {pipeline_mode = #tpu.pipeline_mode<synchronous>, transform_indices = @transform_3, window_bounds = array<i64: 64, 32>}, {pipeline_mode = #tpu.pipeline_mode<synchronous>, transform_indices = @transform_4, window_bounds = array<i64: 64, 1>}, {pipeline_mode = #tpu.pipeline_mode<synchronous>, transform_indices = @transform_5, window_bounds = array<i64: 64, 1>}, {pipeline_mode = #tpu.pipeline_mode<synchronous>, transform_indices = @transform_6, window_bounds = array<i64: 192, 64>}, {pipeline_mode = #tpu.pipeline_mode<synchronous>, transform_indices = @transform_7, window_bounds = array<i64: 192, 1>}, {pipeline_mode = #tpu.pipeline_mode<synchronous>, transform_indices = @transform_8, window_bounds = array<i64: 64, 64>}, {pipeline_mode = #tpu.pipeline_mode<synchronous>, transform_indices = @transform_9, window_bounds = array<i64: 64, 1>}, {transform_indices = @transform_10, window_bounds = array<i64: 1, 64, 64>}]} {
    %c0_i32 = arith.constant 0 : i32
    %0 = arith.cmpi eq, %arg1, %c0_i32 : i32
    %1 = arith.extui %0 : i1 to i32
    %c0_i32_0 = arith.constant 0 : i32
    %2 = arith.cmpi ne, %1, %c0_i32_0 : i32
    scf.if %2 {
      %c0_18 = arith.constant 0 : index
      %c0_19 = arith.constant 0 : index
      %c0_20 = arith.constant 0 : index
      %34 = vector.load %arg2[%c0_18, %c0_19, %c0_20] : memref<1x64x64xf32, #tpu.memory_space<vmem>>, vector<1x64x64xf32>
      %35 = vector.shape_cast %34 : vector<1x64x64xf32> to vector<64x64xf32>
      %cst_21 = arith.constant dense<0.000000e+00> : vector<64xf32>
      %36 = vector.multi_reduction <add>, %35, %cst_21 [1] : vector<64x64xf32> to vector<64xf32>
      %37 = vector.shape_cast %36 : vector<64xf32> to vector<64x1xf32>
      %c0_22 = arith.constant 0 : index
      %c0_23 = arith.constant 0 : index
      %38 = vector.load %arg4[%c0_22, %c0_23] : memref<32x64xf32, #tpu.memory_space<vmem>>, vector<32x64xf32>
      %cst_24 = arith.constant dense<0.000000e+00> : vector<32x1xf32>
      %39 = tpu.matmul %38, %37, %cst_24 {dimension_numbers = #tpu.dot_dimension_numbers<[1], [0], [0], [1], [0, 0, 1, 1], [], []>} : vector<32x64xf32>, vector<64x1xf32>, vector<32x1xf32> -> vector<32x1xf32>
      %cst_25 = arith.constant 7.812500e-03 : f32
      %40 = vector.broadcast %cst_25 : f32 to vector<32x1xf32>
      %41 = arith.mulf %39, %40 : vector<32x1xf32>
      %c0_26 = arith.constant 0 : index
      %c0_27 = arith.constant 0 : index
      %42 = vector.load %arg5[%c0_26, %c0_27] : memref<64x32xf32, #tpu.memory_space<vmem>>, vector<64x32xf32>
      %cst_28 = arith.constant dense<0.000000e+00> : vector<64x1xf32>
      %43 = tpu.matmul %42, %41, %cst_28 {dimension_numbers = #tpu.dot_dimension_numbers<[1], [0], [0], [1], [0, 0, 1, 1], [], []>} : vector<64x32xf32>, vector<32x1xf32>, vector<64x1xf32> -> vector<64x1xf32>
      %44 = vector.broadcast %43 : vector<64x1xf32> to vector<64x64xf32>
      %45 = arith.subf %35, %44 : vector<64x64xf32>
      %46 = arith.mulf %45, %45 : vector<64x64xf32>
      %cst_29 = arith.constant dense<0.000000e+00> : vector<64xf32>
      %47 = vector.multi_reduction <add>, %46, %cst_29 [1] : vector<64x64xf32> to vector<64xf32>
      %48 = vector.shape_cast %47 : vector<64xf32> to vector<64x1xf32>
      %c0_30 = arith.constant 0 : index
      %c0_31 = arith.constant 0 : index
      %49 = vector.load %arg4[%c0_30, %c0_31] : memref<32x64xf32, #tpu.memory_space<vmem>>, vector<32x64xf32>
      %cst_32 = arith.constant dense<0.000000e+00> : vector<32x1xf32>
      %50 = tpu.matmul %49, %48, %cst_32 {dimension_numbers = #tpu.dot_dimension_numbers<[1], [0], [0], [1], [0, 0, 1, 1], [], []>} : vector<32x64xf32>, vector<64x1xf32>, vector<32x1xf32> -> vector<32x1xf32>
      %cst_33 = arith.constant 7.812500e-03 : f32
      %51 = vector.broadcast %cst_33 : f32 to vector<32x1xf32>
      %52 = arith.mulf %50, %51 : vector<32x1xf32>
      %c0_34 = arith.constant 0 : index
      %c0_35 = arith.constant 0 : index
      %53 = vector.load %arg5[%c0_34, %c0_35] : memref<64x32xf32, #tpu.memory_space<vmem>>, vector<64x32xf32>
      %cst_36 = arith.constant 9.99999974E-6 : f32
      %54 = vector.broadcast %cst_36 : f32 to vector<32x1xf32>
      %55 = arith.addf %52, %54 : vector<32x1xf32>
      %56 = math.rsqrt %55 : vector<32x1xf32>
      %cst_37 = arith.constant dense<0.000000e+00> : vector<64x1xf32>
      %57 = tpu.matmul %53, %56, %cst_37 {dimension_numbers = #tpu.dot_dimension_numbers<[1], [0], [0], [1], [0, 0, 1, 1], [], []>} : vector<64x32xf32>, vector<32x1xf32>, vector<64x1xf32> -> vector<64x1xf32>
      %58 = vector.broadcast %57 : vector<64x1xf32> to vector<64x64xf32>
      %59 = arith.mulf %45, %58 : vector<64x64xf32>
      %c0_38 = arith.constant 0 : index
      %c0_39 = arith.constant 0 : index
      %60 = vector.load %arg6[%c0_38, %c0_39] : memref<64x1xf32, #tpu.memory_space<vmem>>, vector<64x1xf32>
      %61 = vector.broadcast %60 : vector<64x1xf32> to vector<64x64xf32>
      %62 = arith.mulf %59, %61 : vector<64x64xf32>
      %c0_40 = arith.constant 0 : index
      %c0_41 = arith.constant 0 : index
      %63 = vector.load %arg7[%c0_40, %c0_41] : memref<64x1xf32, #tpu.memory_space<vmem>>, vector<64x1xf32>
      %64 = vector.broadcast %63 : vector<64x1xf32> to vector<64x64xf32>
      %65 = arith.addf %62, %64 : vector<64x64xf32>
      %66 = arith.truncf %65 : vector<64x64xf32> to vector<64x64xbf16>
      %c0_42 = arith.constant 0 : index
      %c0_43 = arith.constant 0 : index
      %67 = vector.load %arg8[%c0_42, %c0_43] : memref<192x64xbf16, #tpu.memory_space<vmem>>, vector<192x64xbf16>
      %cst_44 = arith.constant dense<0.000000e+00> : vector<192x64xf32>
      %68 = tpu.matmul %67, %66, %cst_44 {dimension_numbers = #tpu.dot_dimension_numbers<[1], [0], [0], [1], [0, 0, 1, 1], [], []>} : vector<192x64xbf16>, vector<64x64xbf16>, vector<192x64xf32> -> vector<192x64xf32>
      %c0_45 = arith.constant 0 : index
      %c0_46 = arith.constant 0 : index
      %69 = vector.load %arg9[%c0_45, %c0_46] : memref<192x1xf32, #tpu.memory_space<vmem>>, vector<192x1xf32>
      %70 = vector.broadcast %69 : vector<192x1xf32> to vector<192x64xf32>
      %71 = arith.addf %68, %70 : vector<192x64xf32>
      %72 = vector.extract_strided_slice %71 {offsets = [0, 0], sizes = [64, 64], strides = [1, 1]} : vector<192x64xf32> to vector<64x64xf32>
      %73 = tpu.transpose %72, [1, 0] : vector<64x64xf32> -> vector<64x64xf32>
      %74 = arith.truncf %73 : vector<64x64xf32> to vector<64x64xbf16>
      %c0_47 = arith.constant 0 : index
      %c0_48 = arith.constant 0 : index
      %75 = vector.load %arg13[%c0_47, %c0_48] : memref<64x64xbf16, #tpu.memory_space<vmem>>, vector<64x64xbf16>
      tpu.vector_store %arg13[%c0_47, %c0_48], %74 {strides = array<i32>} : memref<64x64xbf16, #tpu.memory_space<vmem>>, vector<64x64xbf16>,
      %76 = vector.extract_strided_slice %71 {offsets = [64, 0], sizes = [128, 64], strides = [1, 1]} : vector<192x64xf32> to vector<128x64xf32>
      %77 = arith.truncf %76 : vector<128x64xf32> to vector<128x64xbf16>
      %c0_49 = arith.constant 0 : index
      %c0_50 = arith.constant 0 : index
      %78 = vector.load %arg14[%c0_49, %c0_50] : memref<128x64xbf16, #tpu.memory_space<vmem>>, vector<128x64xbf16>
      tpu.vector_store %arg14[%c0_49, %c0_50], %77 {strides = array<i32>} : memref<128x64xbf16, #tpu.memory_space<vmem>>, vector<128x64xbf16>,
    } else {
    }
    %c64_i32 = arith.constant 64 : i32
    %3 = arith.muli %arg1, %c64_i32 : i32
    %4 = tpu.assume_multiple %3, 64 : i32
    %5 = arith.index_cast %4 : i32 to index
    %c0 = arith.constant 0 : index
    %6 = vector.load %arg13[%5, %c0] : memref<64x64xbf16, #tpu.memory_space<vmem>>, vector<64x64xbf16>
    %c0_1 = arith.constant 0 : index
    %c0_2 = arith.constant 0 : index
    %7 = vector.load %arg14[%c0_1, %c0_2] : memref<128x64xbf16, #tpu.memory_space<vmem>>, vector<64x64xbf16>
    %c64 = arith.constant 64 : index
    %c0_3 = arith.constant 0 : index
    %8 = vector.load %arg14[%c64, %c0_3] : memref<128x64xbf16, #tpu.memory_space<vmem>>, vector<64x64xbf16>
    %cst = arith.constant dense<0.000000e+00> : vector<64x64xf32>
    %9 = tpu.matmul %6, %7, %cst {dimension_numbers = #tpu.dot_dimension_numbers<[1], [0], [0], [1], [0, 0, 1, 1], [], []>} : vector<64x64xbf16>, vector<64x64xbf16>, vector<64x64xf32> -> vector<64x64xf32>
    %cst_4 = arith.constant dense<0xFF800000> : vector<64xf32>
    %10 = vector.multi_reduction <maximumf>, %9, %cst_4 [1] : vector<64x64xf32> to vector<64xf32>
    %11 = vector.shape_cast %10 : vector<64xf32> to vector<64x1xf32>
    %12 = vector.broadcast %11 : vector<64x1xf32> to vector<64x64xf32>
    %13 = arith.subf %9, %12 : vector<64x64xf32>
    %14 = math.exp %13 : vector<64x64xf32>
    %cst_5 = arith.constant dense<0.000000e+00> : vector<64xf32>
    %15 = vector.multi_reduction <add>, %14, %cst_5 [1] : vector<64x64xf32> to vector<64xf32>
    %16 = vector.shape_cast %15 : vector<64xf32> to vector<64x1xf32>
    %17 = tpu.reciprocal %16 {approx = true} : vector<64x1xf32> -> vector<64x1xf32>
    %18 = vector.broadcast %17 : vector<64x1xf32> to vector<64x64xf32>
    %19 = arith.mulf %14, %18 : vector<64x64xf32>
    %20 = arith.truncf %19 : vector<64x64xf32> to vector<64x64xbf16>
    %cst_6 = arith.constant dense<0.000000e+00> : vector<64x64xf32>
    %21 = tpu.matmul %8, %20, %cst_6 {dimension_numbers = #tpu.dot_dimension_numbers<[1], [1], [0], [0], [0, 0, 1, 0], [], []>} : vector<64x64xbf16>, vector<64x64xbf16>, vector<64x64xf32> -> vector<64x64xf32>
    %c0_7 = arith.constant 0 : index
    %c0_8 = arith.constant 0 : index
    %22 = vector.load %arg10[%c0_7, %c0_8] : memref<64x64xbf16, #tpu.memory_space<vmem>>, vector<64x64xbf16>
    %23 = arith.truncf %21 : vector<64x64xf32> to vector<64x64xbf16>
    %cst_9 = arith.constant dense<0.000000e+00> : vector<64x64xf32>
    %24 = tpu.matmul %22, %23, %cst_9 {dimension_numbers = #tpu.dot_dimension_numbers<[1], [0], [0], [1], [0, 0, 1, 1], [], []>} : vector<64x64xbf16>, vector<64x64xbf16>, vector<64x64xf32> -> vector<64x64xf32>
    %c0_10 = arith.constant 0 : index
    %c0_11 = arith.constant 0 : index
    %25 = vector.load %arg11[%c0_10, %c0_11] : memref<64x1xf32, #tpu.memory_space<vmem>>, vector<64x1xf32>
    %26 = vector.broadcast %25 : vector<64x1xf32> to vector<64x64xf32>
    %27 = arith.addf %24, %26 : vector<64x64xf32>
    %c0_12 = arith.constant 0 : index
    %c0_13 = arith.constant 0 : index
    %c0_14 = arith.constant 0 : index
    %28 = vector.load %arg3[%c0_12, %c0_13, %c0_14] : memref<1x64x64xf32, #tpu.memory_space<vmem>>, vector<1x64x64xf32>
    %29 = vector.shape_cast %28 : vector<1x64x64xf32> to vector<64x64xf32>
    %30 = arith.addf %27, %29 : vector<64x64xf32>
    %c0_15 = arith.constant 0 : index
    %c0_16 = arith.constant 0 : index
    %c0_17 = arith.constant 0 : index
    %31 = vector.load %arg12[%c0_15, %c0_16, %c0_17] : memref<1x64x64xf32, #tpu.memory_space<vmem>>, vector<1x64x64xf32>
    %32 = vector.shape_cast %31 : vector<1x64x64xf32> to vector<64x64xf32>
    %33 = vector.shape_cast %30 : vector<64x64xf32> to vector<1x64x64xf32>
    tpu.vector_store %arg12[%c0_15, %c0_16, %c0_17], %33 {strides = array<i32>} : memref<1x64x64xf32, #tpu.memory_space<vmem>>, vector<1x64x64xf32>,
    return
  }
  func.func @transform_0(%arg0: i32, %arg1: i32) -> (i32, i32, i32) {
    %c0_i32 = arith.constant 0 : i32
    %c0_i32_0 = arith.constant 0 : i32
    %c0_i32_1 = arith.constant 0 : i32
    return %arg0, %c0_i32, %c0_i32_0 : i32, i32, i32
  }
  func.func @transform_1(%arg0: i32, %arg1: i32) -> (i32, i32, i32) {
    %c0_i32 = arith.constant 0 : i32
    %c0_i32_0 = arith.constant 0 : i32
    return %arg0, %c0_i32, %arg1 : i32, i32, i32
  }
  func.func @transform_2(%arg0: i32, %arg1: i32) -> (i32, i32) {
    %c0_i32 = arith.constant 0 : i32
    %c0_i32_0 = arith.constant 0 : i32
    %c0_i32_1 = arith.constant 0 : i32
    return %c0_i32, %c0_i32_0 : i32, i32
  }
  func.func @transform_3(%arg0: i32, %arg1: i32) -> (i32, i32) {
    %c0_i32 = arith.constant 0 : i32
    %c0_i32_0 = arith.constant 0 : i32
    %c0_i32_1 = arith.constant 0 : i32
    return %c0_i32, %c0_i32_0 : i32, i32
  }
  func.func @transform_4(%arg0: i32, %arg1: i32) -> (i32, i32) {
    %c0_i32 = arith.constant 0 : i32
    %c0_i32_0 = arith.constant 0 : i32
    %c0_i32_1 = arith.constant 0 : i32
    return %c0_i32, %c0_i32_0 : i32, i32
  }
  func.func @transform_5(%arg0: i32, %arg1: i32) -> (i32, i32) {
    %c0_i32 = arith.constant 0 : i32
    %c0_i32_0 = arith.constant 0 : i32
    %c0_i32_1 = arith.constant 0 : i32
    return %c0_i32, %c0_i32_0 : i32, i32
  }
  func.func @transform_6(%arg0: i32, %arg1: i32) -> (i32, i32) {
    %c0_i32 = arith.constant 0 : i32
    %c0_i32_0 = arith.constant 0 : i32
    %c0_i32_1 = arith.constant 0 : i32
    return %c0_i32, %c0_i32_0 : i32, i32
  }
  func.func @transform_7(%arg0: i32, %arg1: i32) -> (i32, i32) {
    %c0_i32 = arith.constant 0 : i32
    %c0_i32_0 = arith.constant 0 : i32
    %c0_i32_1 = arith.constant 0 : i32
    return %c0_i32, %c0_i32_0 : i32, i32
  }
  func.func @transform_8(%arg0: i32, %arg1: i32) -> (i32, i32) {
    %c0_i32 = arith.constant 0 : i32
    %c0_i32_0 = arith.constant 0 : i32
    %c0_i32_1 = arith.constant 0 : i32
    return %c0_i32, %c0_i32_0 : i32, i32
  }
  func.func @transform_9(%arg0: i32, %arg1: i32) -> (i32, i32) {
    %c0_i32 = arith.constant 0 : i32
    %c0_i32_0 = arith.constant 0 : i32
    %c0_i32_1 = arith.constant 0 : i32
    return %c0_i32, %c0_i32_0 : i32, i32
  }
  func.func @transform_10(%arg0: i32, %arg1: i32) -> (i32, i32, i32) {
    %c0_i32 = arith.constant 0 : i32
    %c0_i32_0 = arith.constant 0 : i32
    return %arg0, %c0_i32, %arg1 : i32, i32, i32
  }
}

</mosaic_0001>

<llo_original>
// kernel: tpu_custom_call.1
$region0: #{tpu_custom_call.1}
  #allocation0 [shape = 'u32[]', space=smem, size = 0x4, offset = 0x4, fixed_abs, tag = 'smem constant byte address 0x4 - core index']
  #allocation1 [shape = 'u32[144,128]{1,0:T(1,128)}', space=vmem, size = 0x12000, scoped, tag = 'internal scratch']
  #allocation2 [shape = 'bf16[64,64]{1,0:T(16,128)(2,1)}', space=vmem, size = 0x4000, scoped, tag = 'scratch operand']
  #allocation3 [shape = 'bf16[128,64]{1,0:T(16,128)(2,1)}', space=vmem, size = 0x8000, scoped, tag = 'scratch operand']
  %s0 = inlined_call_operand.hbm [shape: f32[2,64,64], index: 0, kind: input, shape index: {}]
  %s1 = inlined_call_operand.hbm [shape: f32[2,64,64], index: 1, kind: input, shape index: {}]
  %s2 = inlined_call_operand.hbm [shape: f32[32,64], index: 2, kind: input, shape index: {}]
  %s3 = inlined_call_operand.hbm [shape: f32[64,32], index: 3, kind: input, shape index: {}]
  %s4 = inlined_call_operand.hbm [shape: f32[64,1], index: 4, kind: input, shape index: {}]
  %s5 = inlined_call_operand.hbm [shape: f32[64,1], index: 5, kind: input, shape index: {}]
  %s6 = inlined_call_operand.hbm [shape: bf16[192,64], index: 6, kind: input, shape index: {}]
  %s7 = inlined_call_operand.hbm [shape: f32[192,1], index: 7, kind: input, shape index: {}]
  %s8 = inlined_call_operand.hbm [shape: bf16[64,64], index: 8, kind: input, shape index: {}]
  %s9 = inlined_call_operand.hbm [shape: f32[64,1], index: 9, kind: input, shape index: {}]
  %s10 = inlined_call_operand.hbm [shape: f32[2,64,64], index: 10, kind: output, shape index: {}]
  %s11 = sld [smem:[#allocation0]]
  $region117: #{tpu_custom_call.1} parent=0
    _
  %s13 = ssub.s32 1, %s11
  %s14 = scalar_select 0, %s13, %s11
  $region1: #{tpu_custom_call.1} parent=0
    #allocation4 [shape = 'u8[65536]{0}', space=vmem, size = 0x10000, scoped, tag = 'input window, operand 0']
    #allocation5 [shape = 's32[2]{0}', space=sflag, size = 0x8, scoped, tag = 'scoped memory for tpu_custom_call.1']
    #allocation6 [shape = 's32[2]{0}', space=sflag, size = 0x8, scoped, tag = 'scoped memory for tpu_custom_call.1']
    #allocation7 [shape = 'u8[65536]{0}', space=vmem, size = 0x10000, scoped, tag = 'input window, operand 1']
    #allocation8 [shape = 's32[2]{0}', space=sflag, size = 0x8, scoped, tag = 'scoped memory for tpu_custom_call.1']
    #allocation9 [shape = 'u8[16384]{0}', space=vmem, size = 0x4000, scoped, tag = 'input window, operand 2, single buffered']
    #allocation10 [shape = 'u8[32768]{0}', space=vmem, size = 0x8000, scoped, tag = 'input window, operand 3, single buffered']
    #allocation11 [shape = 's32[1]{0}', space=sflag, size = 0x4, scoped, tag = 'scoped memory for tpu_custom_call.1']
    #allocation12 [shape = 'u8[32768]{0}', space=vmem, size = 0x8000, scoped, tag = 'input window, operand 4, single buffered']
    #allocation13 [shape = 'u8[32768]{0}', space=vmem, size = 0x8000, scoped, tag = 'input window, operand 5, single buffered']
    #allocation14 [shape = 's32[1]{0}', space=sflag, size = 0x4, scoped, tag = 'scoped memory for tpu_custom_call.1']
    #allocation15 [shape = 'u8[49152]{0}', space=vmem, size = 0xc000, scoped, tag = 'input window, operand 6, single buffered']
    #allocation16 [shape = 'u8[98304]{0}', space=vmem, size = 0x18000, scoped, tag = 'input window, operand 7, single buffered']
    #allocation17 [shape = 's32[1]{0}', space=sflag, size = 0x4, scoped, tag = 'scoped memory for tpu_custom_call.1']
    #allocation18 [shape = 'u8[16384]{0}', space=vmem, size = 0x4000, scoped, tag = 'input window, operand 8, single buffered']
    #allocation19 [shape = 'u8[32768]{0}', space=vmem, size = 0x8000, scoped, tag = 'input window, operand 9, single buffered']
    #allocation20 [shape = 's32[1]{0}', space=sflag, size = 0x4, scoped, tag = 'scoped memory for tpu_custom_call.1']
    #allocation21 [shape = 'u8[65536]{0}', space=vmem, size = 0x10000, scoped, tag = 'output window, operand 0']
    %15 = vsyncpa [#allocation5], 0
    %s16 = scalar_lea.sflag [#allocation5], 1
    %17 = vsyncpa %s16, 0
    %18 = vsyncpa [#allocation8], 0
    %s19 = scalar_lea.sflag [#allocation8], 1
    %20 = vsyncpa %s19, 0
    %21 = vsyncpa [#allocation11], 0
    %22 = vsyncpa [#allocation14], 0
    %23 = vsyncpa [#allocation17], 0
    %24 = vsyncpa [#allocation20], 0
    %25 = vsyncpa [#allocation6], 0
    %s26 = scalar_lea.sflag [#allocation6], 1
    %27 = vsyncpa %s26, 0
    loop: start=0, step=1, limit=4
    $region2: #{tpu_custom_call.1} parent=1 // loop_pre_header
      _
    $region3: #{tpu_custom_call.1} parent=1 // loop_header
      %s29 = sphi 0, %s33
      %p30 = scmp.ge.s32.totalorder %s29, 4
      %s36 = sphi 0, %s48
      %s37 = sphi 0, %s44
      %s38 = sphi 0, %s36
      %s39 = sphi 0, %s37
      %s40 = sphi 0, %s38
      %s41 = sphi 0, %s39
      %s51 = sphi 0, %s53
      %s54 = sphi 0, %s51
      %s55 = sphi 0, %s54
      %s71 = sphi 0, %s55
      %s79 = sphi 0, %s81
      %s82 = sphi 0, %s79
      %s83 = sphi 0, %s82
      %s99 = sphi 0, %s83
      %s103 = sphi 0, %s103
      %s105 = sphi 0, %s103
      %s106 = sphi 0, %s105
      %s120 = sphi 0, %s106
      %s124 = sphi 0, %s124
      %s126 = sphi 0, %s124
      %s127 = sphi 0, %s126
      %s141 = sphi 0, %s127
      %s145 = sphi 0, %s145
      %s147 = sphi 0, %s145
      %s148 = sphi 0, %s147
      %s162 = sphi 0, %s148
      %s166 = sphi 0, %s166
      %s168 = sphi 0, %s166
      %s169 = sphi 0, %s168
      %s183 = sphi 0, %s169
      %s187 = sphi 0, %s187
      %s189 = sphi 0, %s187
      %s190 = sphi 0, %s189
      %s204 = sphi 0, %s190
      %s208 = sphi 0, %s208
      %s210 = sphi 0, %s208
      %s211 = sphi 0, %s210
      %s225 = sphi 0, %s211
      %s229 = sphi 0, %s229
      %s231 = sphi 0, %s229
      %s232 = sphi 0, %s231
      %s246 = sphi 0, %s232
      %s250 = sphi 0, %s250
      %s252 = sphi 0, %s250
      %s253 = sphi 0, %s252
      %s267 = sphi 0, %s253
      %s275 = sphi 0, %s277
      %s278 = sphi 0, %s275
      %s279 = sphi 0, %s278
      %s295 = sphi 0, %s279
    $region4: #{tpu_custom_call.1} parent=1 // loop_header_branch
      %32 = sbr.rel (%p30) target = $region8
    $region5: #{tpu_custom_call.1} parent=1 // loop_body
      %s34 = ssub.s32 %s29, 1
      %s35 = ssub.s32 %s29, 2
      %s42 = sadd.s32 1, %s37
      %p43 = scmp.ge.s32.totalorder %s42, 1
      %s44 = scalar_select %p43, 0, %s42
      %s45 = sadd.s32 1, %s36
      %s46 = scalar_select %p43, %s45, %s36
      %p47 = scmp.ge.s32.totalorder %s46, 2
      %s48 = scalar_select %p47, 0, %s46
      %s49 = ssub.s32 %s36, %s48
      %p50 = scmp.eq.s32.totalorder %s49, 0
      %s52 = sadd.s32 %s51, 1
      %s53 = scalar_select %p50, %s51, %s52
      %p56 = pneg %p50
      %p57 = scmp.eq.s32.totalorder %s29, 1
      %p58 = por %p56, %p57
      %p59 = scmp.ne.s32.totalorder %s51, %s54
      %p60 = scmp.eq.s32.totalorder %s29, 0
      %p61 = por %p59, %p60
      %p62 = scmp.ne.s32.totalorder %s51, %s54
      %p63 = scmp.eq.s32.totalorder %s34, 1
      %p64 = por %p62, %p63
      %p65 = scmp.ne.s32.totalorder %s54, %s55
      %p66 = scmp.eq.s32.totalorder %s34, 0
      %p67 = por %p65, %p66
      %p68 = scmp.ne.s32.totalorder %s54, %s55
      %p69 = scmp.eq.s32.totalorder %s35, 1
      %p70 = por %p68, %p69
      %p72 = scmp.ne.s32.totalorder %s55, %s71
      %p73 = scmp.eq.s32.totalorder %s35, 0
      %p74 = por %p72, %p73
      %s75 = ssub.s32 %s36, %s48
      %s76 = ssub.s32 %s37, %s44
      %s77 = sor.u32 %s75, %s76
      %p78 = scmp.eq.s32.totalorder %s77, 0
      %s80 = sadd.s32 %s79, 1
      %s81 = scalar_select %p78, %s79, %s80
      %p84 = pneg %p78
      %p85 = scmp.eq.s32.totalorder %s29, 1
      %p86 = por %p84, %p85
      %p87 = scmp.ne.s32.totalorder %s79, %s82
      %p88 = scmp.eq.s32.totalorder %s29, 0
      %p89 = por %p87, %p88
      %p90 = scmp.ne.s32.totalorder %s79, %s82
      %p91 = scmp.eq.s32.totalorder %s34, 1
      %p92 = por %p90, %p91
      %p93 = scmp.ne.s32.totalorder %s82, %s83
      %p94 = scmp.eq.s32.totalorder %s34, 0
      %p95 = por %p93, %p94
      %p96 = scmp.ne.s32.totalorder %s82, %s83
      %p97 = scmp.eq.s32.totalorder %s35, 1
      %p98 = por %p96, %p97
      %p100 = scmp.ne.s32.totalorder %s83, %s99
      %p101 = scmp.eq.s32.totalorder %s35, 0
      %p102 = por %p100, %p101
      %s104 = sadd.s32 %s103, 1
      %p107 = scmp.eq.s32.totalorder %s29, 1
      %p108 = scmp.ne.s32.totalorder %s103, %s105
      %p109 = scmp.eq.s32.totalorder %s29, 0
      %p110 = por %p108, %p109
      %p111 = scmp.ne.s32.totalorder %s103, %s105
      %p112 = scmp.eq.s32.totalorder %s34, 1
      %p113 = por %p111, %p112
      %p114 = scmp.ne.s32.totalorder %s105, %s106
      %p115 = scmp.eq.s32.totalorder %s34, 0
      %p116 = por %p114, %p115
      %p117 = scmp.ne.s32.totalorder %s105, %s106
      %p118 = scmp.eq.s32.totalorder %s35, 1
      %p119 = por %p117, %p118
      %p121 = scmp.ne.s32.totalorder %s106, %s120
      %p122 = scmp.eq.s32.totalorder %s35, 0
      %p123 = por %p121, %p122
      %s125 = sadd.s32 %s124, 1
      %p128 = scmp.eq.s32.totalorder %s29, 1
      %p129 = scmp.ne.s32.totalorder %s124, %s126
      %p130 = scmp.eq.s32.totalorder %s29, 0
      %p131 = por %p129, %p130
      %p132 = scmp.ne.s32.totalorder %s124, %s126
      %p133 = scmp.eq.s32.totalorder %s34, 1
      %p134 = por %p132, %p133
      %p135 = scmp.ne.s32.totalorder %s126, %s127
      %p136 = scmp.eq.s32.totalorder %s34, 0
      %p137 = por %p135, %p136
      %p138 = scmp.ne.s32.totalorder %s126, %s127
      %p139 = scmp.eq.s32.totalorder %s35, 1
      %p140 = por %p138, %p139
      %p142 = scmp.ne.s32.totalorder %s127, %s141
      %p143 = scmp.eq.s32.totalorder %s35, 0
      %p144 = por %p142, %p143
      %s146 = sadd.s32 %s145, 1
      %p149 = scmp.eq.s32.totalorder %s29, 1
      %p150 = scmp.ne.s32.totalorder %s145, %s147
      %p151 = scmp.eq.s32.totalorder %s29, 0
      %p152 = por %p150, %p151
      %p153 = scmp.ne.s32.totalorder %s145, %s147
      %p154 = scmp.eq.s32.totalorder %s34, 1
      %p155 = por %p153, %p154
      %p156 = scmp.ne.s32.totalorder %s147, %s148
      %p157 = scmp.eq.s32.totalorder %s34, 0
      %p158 = por %p156, %p157
      %p159 = scmp.ne.s32.totalorder %s147, %s148
      %p160 = scmp.eq.s32.totalorder %s35, 1
      %p161 = por %p159, %p160
      %p163 = scmp.ne.s32.totalorder %s148, %s162
      %p164 = scmp.eq.s32.totalorder %s35, 0
      %p165 = por %p163, %p164
      %s167 = sadd.s32 %s166, 1
      %p170 = scmp.eq.s32.totalorder %s29, 1
      %p171 = scmp.ne.s32.totalorder %s166, %s168
      %p172 = scmp.eq.s32.totalorder %s29, 0
      %p173 = por %p171, %p172
      %p174 = scmp.ne.s32.totalorder %s166, %s168
      %p175 = scmp.eq.s32.totalorder %s34, 1
      %p176 = por %p174, %p175
      %p177 = scmp.ne.s32.totalorder %s168, %s169
      %p178 = scmp.eq.s32.totalorder %s34, 0
      %p179 = por %p177, %p178
      %p180 = scmp.ne.s32.totalorder %s168, %s169
      %p181 = scmp.eq.s32.totalorder %s35, 1
      %p182 = por %p180, %p181
      %p184 = scmp.ne.s32.totalorder %s169, %s183
      %p185 = scmp.eq.s32.totalorder %s35, 0
      %p186 = por %p184, %p185
      %s188 = sadd.s32 %s187, 1
      %p191 = scmp.eq.s32.totalorder %s29, 1
      %p192 = scmp.ne.s32.totalorder %s187, %s189
      %p193 = scmp.eq.s32.totalorder %s29, 0
      %p194 = por %p192, %p193
      %p195 = scmp.ne.s32.totalorder %s187, %s189
      %p196 = scmp.eq.s32.totalorder %s34, 1
      %p197 = por %p195, %p196
      %p198 = scmp.ne.s32.totalorder %s189, %s190
      %p199 = scmp.eq.s32.totalorder %s34, 0
      %p200 = por %p198, %p199
      %p201 = scmp.ne.s32.totalorder %s189, %s190
      %p202 = scmp.eq.s32.totalorder %s35, 1
      %p203 = por %p201, %p202
      %p205 = scmp.ne.s32.totalorder %s190, %s204
      %p206 = scmp.eq.s32.totalorder %s35, 0
      %p207 = por %p205, %p206
      %s209 = sadd.s32 %s208, 1
      %p212 = scmp.eq.s32.totalorder %s29, 1
      %p213 = scmp.ne.s32.totalorder %s208, %s210
      %p214 = scmp.eq.s32.totalorder %s29, 0
      %p215 = por %p213, %p214
      %p216 = scmp.ne.s32.totalorder %s208, %s210
      %p217 = scmp.eq.s32.totalorder %s34, 1
      %p218 = por %p216, %p217
      %p219 = scmp.ne.s32.totalorder %s210, %s211
      %p220 = scmp.eq.s32.totalorder %s34, 0
      %p221 = por %p219, %p220
      %p222 = scmp.ne.s32.totalorder %s210, %s211
      %p223 = scmp.eq.s32.totalorder %s35, 1
      %p224 = por %p222, %p223
      %p226 = scmp.ne.s32.totalorder %s211, %s225
      %p227 = scmp.eq.s32.totalorder %s35, 0
      %p228 = por %p226, %p227
      %s230 = sadd.s32 %s229, 1
      %p233 = scmp.eq.s32.totalorder %s29, 1
      %p234 = scmp.ne.s32.totalorder %s229, %s231
      %p235 = scmp.eq.s32.totalorder %s29, 0
      %p236 = por %p234, %p235
      %p237 = scmp.ne.s32.totalorder %s229, %s231
      %p238 = scmp.eq.s32.totalorder %s34, 1
      %p239 = por %p237, %p238
      %p240 = scmp.ne.s32.totalorder %s231, %s232
      %p241 = scmp.eq.s32.totalorder %s34, 0
      %p242 = por %p240, %p241
      %p243 = scmp.ne.s32.totalorder %s231, %s232
      %p244 = scmp.eq.s32.totalorder %s35, 1
      %p245 = por %p243, %p244
      %p247 = scmp.ne.s32.totalorder %s232, %s246
      %p248 = scmp.eq.s32.totalorder %s35, 0
      %p249 = por %p247, %p248
      %s251 = sadd.s32 %s250, 1
      %p254 = scmp.eq.s32.totalorder %s29, 1
      %p255 = scmp.ne.s32.totalorder %s250, %s252
      %p256 = scmp.eq.s32.totalorder %s29, 0
      %p257 = por %p255, %p256
      %p258 = scmp.ne.s32.totalorder %s250, %s252
      %p259 = scmp.eq.s32.totalorder %s34, 1
      %p260 = por %p258, %p259
      %p261 = scmp.ne.s32.totalorder %s252, %s253
      %p262 = scmp.eq.s32.totalorder %s34, 0
      %p263 = por %p261, %p262
      %p264 = scmp.ne.s32.totalorder %s252, %s253
      %p265 = scmp.eq.s32.totalorder %s35, 1
      %p266 = por %p264, %p265
      %p268 = scmp.ne.s32.totalorder %s253, %s267
      %p269 = scmp.eq.s32.totalorder %s35, 0
      %p270 = por %p268, %p269
      %s271 = ssub.s32 %s36, %s48
      %s272 = ssub.s32 %s37, %s44
      %s273 = sor.u32 %s271, %s272
      %p274 = scmp.eq.s32.totalorder %s273, 0
      %s276 = sadd.s32 %s275, 1
      %s277 = scalar_select %p274, %s275, %s276
      %p280 = pneg %p274
      %p281 = scmp.eq.s32.totalorder %s29, 1
      %p282 = por %p280, %p281
      %p283 = scmp.ne.s32.totalorder %s275, %s278
      %p284 = scmp.eq.s32.totalorder %s29, 0
      %p285 = por %p283, %p284
      %p286 = scmp.ne.s32.totalorder %s275, %s278
      %p287 = scmp.eq.s32.totalorder %s34, 1
      %p288 = por %p286, %p287
      %p289 = scmp.ne.s32.totalorder %s278, %s279
      %p290 = scmp.eq.s32.totalorder %s34, 0
      %p291 = por %p289, %p290
      %p292 = scmp.ne.s32.totalorder %s278, %s279
      %p293 = scmp.eq.s32.totalorder %s35, 1
      %p294 = por %p292, %p293
      %p296 = scmp.ne.s32.totalorder %s279, %s295
      %p297 = scmp.eq.s32.totalorder %s35, 0
      %p298 = por %p296, %p297
      %p299 = scmp.le.s32.totalorder 1, %s29
      %p300 = scmp.lt.s32.totalorder %s29, 3
      %p301 = pnand %p299, %p300
      %p302 = pneg %p301
      // Predicated region
      $region9: #{tpu_custom_call.1} parent=5 // pred_check
        _
      $region10: #{tpu_custom_call.1} parent=5 // pred_check_branch
        %304 = sbr.rel (%p301) target = $region12
      $region11: #{tpu_custom_call.1} parent=5 // pred_region
        %s305 = ssub.s32 %s29, 1
        // Predicated region
        $region13: #{tpu_custom_call.1} parent=11 // pred_check
          %p306 = pneg %p116
        $region14: #{tpu_custom_call.1} parent=11 // pred_check_branch
          %308 = sbr.rel (%p306) target = $region16
        $region15: #{tpu_custom_call.1} parent=11 // pred_region
          %s310 = ssub.s32 512, 512
          %311 = vsyncadd [#allocation8], %s310
          %s312 = sshll.u32 [#allocation9], 4
          %s313 = int_to_ptr.vmem [resolvable:$true] %s312
          %318 = dma.hbm_to_vmem [thread:$0]  %s2, 512, %s313, [#allocation8], 128, 128, 8
        $region16: #{tpu_custom_call.1} parent=11 // pred_fallthru
          _
        // Predicated region
        $region17: #{tpu_custom_call.1} parent=11 // pred_check
          %p319 = pneg %p137
        $region18: #{tpu_custom_call.1} parent=11 // pred_check_branch
          %321 = sbr.rel (%p319) target = $region20
        $region19: #{tpu_custom_call.1} parent=11 // pred_region
          %s323 = ssub.s32 1024, 1024
          %324 = vsyncadd [#allocation11], %s323
          %s325 = sshll.u32 [#allocation10], 4
          %s326 = int_to_ptr.vmem [resolvable:$true] %s325
          %331 = dma.hbm_to_vmem [thread:$0]  %s3, 1024, %s326, [#allocation11], 128, 128, 8
        $region20: #{tpu_custom_call.1} parent=11 // pred_fallthru
          _
        // Predicated region
        $region21: #{tpu_custom_call.1} parent=11 // pred_check
          %p332 = pneg %p158
        $region22: #{tpu_custom_call.1} parent=11 // pred_check_branch
          %334 = sbr.rel (%p332) target = $region24
        $region23: #{tpu_custom_call.1} parent=11 // pred_region
          %s336 = ssub.s32 1024, 1024
          %337 = vsyncadd [#allocation11], %s336
          %s338 = sshll.u32 [#allocation12], 4
          %s339 = int_to_ptr.vmem [resolvable:$true] %s338
          %344 = dma.hbm_to_vmem [thread:$0]  %s4, 1024, %s339, [#allocation11], 128, 128, 8
        $region24: #{tpu_custom_call.1} parent=11 // pred_fallthru
          _
        // Predicated region
        $region25: #{tpu_custom_call.1} parent=11 // pred_check
          %p345 = pneg %p179
        $region26: #{tpu_custom_call.1} parent=11 // pred_check_branch
          %347 = sbr.rel (%p345) target = $region28
        $region27: #{tpu_custom_call.1} parent=11 // pred_region
          %s349 = ssub.s32 1024, 1024
          %350 = vsyncadd [#allocation14], %s349
          %s351 = sshll.u32 [#allocation13], 4
          %s352 = int_to_ptr.vmem [resolvable:$true] %s351
          %357 = dma.hbm_to_vmem [thread:$0]  %s5, 1024, %s352, [#allocation14], 128, 128, 8
        $region28: #{tpu_custom_call.1} parent=11 // pred_fallthru
          _
        // Predicated region
        $region29: #{tpu_custom_call.1} parent=11 // pred_check
          %p358 = pneg %p200
        $region30: #{tpu_custom_call.1} parent=11 // pred_check_branch
          %360 = sbr.rel (%p358) target = $region32
        $region31: #{tpu_custom_call.1} parent=11 // pred_region
          %s362 = ssub.s32 1536, 1536
          %363 = vsyncadd [#allocation14], %s362
          %s364 = sshll.u32 [#allocation15], 4
          %s365 = int_to_ptr.vmem [resolvable:$true] %s364
          %370 = dma.hbm_to_vmem [thread:$0]  %s6, 1536, %s365, [#allocation14], 64, 64, 4
        $region32: #{tpu_custom_call.1} parent=11 // pred_fallthru
          _
        // Predicated region
        $region33: #{tpu_custom_call.1} parent=11 // pred_check
          %p371 = pneg %p221
        $region34: #{tpu_custom_call.1} parent=11 // pred_check_branch
          %373 = sbr.rel (%p371) target = $region36
        $region35: #{tpu_custom_call.1} parent=11 // pred_region
          %s375 = ssub.s32 3072, 3072
          %376 = vsyncadd [#allocation17], %s375
          %s377 = sshll.u32 [#allocation16], 4
          %s378 = int_to_ptr.vmem [resolvable:$true] %s377
          %383 = dma.hbm_to_vmem [thread:$0]  %s7, 3072, %s378, [#allocation17], 128, 128, 8
        $region36: #{tpu_custom_call.1} parent=11 // pred_fallthru
          _
        // Predicated region
        $region37: #{tpu_custom_call.1} parent=11 // pred_check
          %p384 = pneg %p242
        $region38: #{tpu_custom_call.1} parent=11 // pred_check_branch
          %386 = sbr.rel (%p384) target = $region40
        $region39: #{tpu_custom_call.1} parent=11 // pred_region
          %s388 = ssub.s32 512, 512
          %389 = vsyncadd [#allocation17], %s388
          %s390 = sshll.u32 [#allocation18], 4
          %s391 = int_to_ptr.vmem [resolvable:$true] %s390
          %396 = dma.hbm_to_vmem [thread:$0]  %s8, 512, %s391, [#allocation17], 64, 64, 4
        $region40: #{tpu_custom_call.1} parent=11 // pred_fallthru
          _
        // Predicated region
        $region41: #{tpu_custom_call.1} parent=11 // pred_check
          %p397 = pneg %p263
        $region42: #{tpu_custom_call.1} parent=11 // pred_check_branch
          %399 = sbr.rel (%p397) target = $region44
        $region43: #{tpu_custom_call.1} parent=11 // pred_region
          %s401 = ssub.s32 1024, 1024
          %402 = vsyncadd [#allocation20], %s401
          %s403 = sshll.u32 [#allocation19], 4
          %s404 = int_to_ptr.vmem [resolvable:$true] %s403
          %409 = dma.hbm_to_vmem [thread:$0]  %s9, 1024, %s404, [#allocation20], 128, 128, 8
        $region44: #{tpu_custom_call.1} parent=11 // pred_fallthru
          _
      $region12: #{tpu_custom_call.1} parent=5 // pred_fallthru
        _
      %p410 = scmp.lt.s32.totalorder %s29, 2
      // Predicated region
      $region45: #{tpu_custom_call.1} parent=5 // pred_check
        %p411 = pneg %p410
      $region46: #{tpu_custom_call.1} parent=5 // pred_check_branch
        %413 = sbr.rel (%p411) target = $region48
      $region47: #{tpu_custom_call.1} parent=5 // pred_region
        // Predicated region
        $region49: #{tpu_custom_call.1} parent=47 // pred_check
          %p414 = pneg %p61
        $region50: #{tpu_custom_call.1} parent=47 // pred_check_branch
          %416 = sbr.rel (%p414) target = $region52
        $region51: #{tpu_custom_call.1} parent=47 // pred_region
          %s417 = sand.u32 %s51, 1
          %s418 = scalar_lea.sflag [#allocation5], %s417
          %s419 = sand.u32 %s51, 1
          %s420 = smul.addr %s419, 64
          %s421 = scalar_lea.vmem [#allocation4], %s420
          %s423 = ssub.s32 1024, 1024
          %424 = vsyncadd %s418, %s423
          %s425 = smul.addr %s36, 8
          %s426 = smul.addr %s425, 128
          %s427 = scalar_lea.hbm %s0, %s426
          %s428 = sshll.u32 %s421, 4
          %s429 = int_to_ptr.vmem [resolvable:$true] %s428
          %434 = dma.hbm_to_vmem [thread:$0]  %s427, 1024, %s429, %s418, 128, 128, 8
        $region52: #{tpu_custom_call.1} parent=47 // pred_fallthru
          _
        // Predicated region
        $region53: #{tpu_custom_call.1} parent=47 // pred_check
          %p435 = pneg %p89
        $region54: #{tpu_custom_call.1} parent=47 // pred_check_branch
          %437 = sbr.rel (%p435) target = $region56
        $region55: #{tpu_custom_call.1} parent=47 // pred_region
          %s438 = sand.u32 %s29, 1
          %s439 = scalar_lea.sflag [#allocation8], %s438
          %s440 = sand.u32 %s79, 1
          %s441 = smul.addr %s440, 64
          %s442 = scalar_lea.vmem [#allocation7], %s441
          %s444 = ssub.s32 1024, 1024
          %445 = vsyncadd %s439, %s444
          %s446 = smul.addr %s36, 8
          %s447 = sadd.s32 %s37, %s446
          %s448 = smul.addr %s447, 128
          %s449 = scalar_lea.hbm %s1, %s448
          %s450 = sshll.u32 %s442, 4
          %s451 = int_to_ptr.vmem [resolvable:$true] %s450
          %456 = dma.hbm_to_vmem [thread:$0]  %s449, 1024, %s451, %s439, 128, 128, 8
        $region56: #{tpu_custom_call.1} parent=47 // pred_fallthru
          _
      $region48: #{tpu_custom_call.1} parent=5 // pred_fallthru
        _
      %p457 = scmp.le.s32.totalorder 1, %s29
      %p458 = scmp.lt.s32.totalorder %s29, 3
      %p459 = pnand %p457, %p458
      %p460 = pneg %p459
      // Predicated region
      $region57: #{tpu_custom_call.1} parent=5 // pred_check
        _
      $region58: #{tpu_custom_call.1} parent=5 // pred_check_branch
        %462 = sbr.rel (%p459) target = $region60
      $region59: #{tpu_custom_call.1} parent=5 // pred_region
        %s463 = ssub.s32 %s29, 1
        %s464 = sand.u32 %s54, 1
        %s465 = scalar_lea.sflag [#allocation5], %s464
        %s466 = sand.u32 %s54, 1
        %s467 = smul.addr %s466, 64
        %s468 = scalar_lea.vmem [#allocation4], %s467
        // Predicated region
        $region61: #{tpu_custom_call.1} parent=59 // pred_check
          %p469 = pneg %p67
        $region62: #{tpu_custom_call.1} parent=59 // pred_check_branch
          %471 = sbr.rel (%p469) target = $region64
        $region63: #{tpu_custom_call.1} parent=59 // pred_region
          %472 = dma.done %s465, 1024
        $region64: #{tpu_custom_call.1} parent=59 // pred_fallthru
          _
        %s473 = sand.u32 %s34, 1
        %s474 = scalar_lea.sflag [#allocation8], %s473
        %s475 = sand.u32 %s82, 1
        %s476 = smul.addr %s475, 64
        %s477 = scalar_lea.vmem [#allocation7], %s476
        // Predicated region
        $region65: #{tpu_custom_call.1} parent=59 // pred_check
          %p478 = pneg %p95
        $region66: #{tpu_custom_call.1} parent=59 // pred_check_branch
          %480 = sbr.rel (%p478) target = $region68
        $region67: #{tpu_custom_call.1} parent=59 // pred_region
          %481 = dma.done %s474, 1024
        $region68: #{tpu_custom_call.1} parent=59 // pred_fallthru
          _
        // Predicated region
        $region69: #{tpu_custom_call.1} parent=59 // pred_check
          %p482 = pneg %p116
        $region70: #{tpu_custom_call.1} parent=59 // pred_check_branch
          %484 = sbr.rel (%p482) target = $region72
        $region71: #{tpu_custom_call.1} parent=59 // pred_region
          %485 = dma.done [#allocation8], 512
        $region72: #{tpu_custom_call.1} parent=59 // pred_fallthru
          _
        // Predicated region
        $region73: #{tpu_custom_call.1} parent=59 // pred_check
          %p486 = pneg %p137
        $region74: #{tpu_custom_call.1} parent=59 // pred_check_branch
          %488 = sbr.rel (%p486) target = $region76
        $region75: #{tpu_custom_call.1} parent=59 // pred_region
          %489 = dma.done [#allocation11], 1024
        $region76: #{tpu_custom_call.1} parent=59 // pred_fallthru
          _
        // Predicated region
        $region77: #{tpu_custom_call.1} parent=59 // pred_check
          %p490 = pneg %p158
        $region78: #{tpu_custom_call.1} parent=59 // pred_check_branch
          %492 = sbr.rel (%p490) target = $region80
        $region79: #{tpu_custom_call.1} parent=59 // pred_region
          %493 = dma.done [#allocation11], 1024
        $region80: #{tpu_custom_call.1} parent=59 // pred_fallthru
          _
        // Predicated region
        $region81: #{tpu_custom_call.1} parent=59 // pred_check
          %p494 = pneg %p179
        $region82: #{tpu_custom_call.1} parent=59 // pred_check_branch
          %496 = sbr.rel (%p494) target = $region84
        $region83: #{tpu_custom_call.1} parent=59 // pred_region
          %497 = dma.done [#allocation14], 1024
        $region84: #{tpu_custom_call.1} parent=59 // pred_fallthru
          _
        // Predicated region
        $region85: #{tpu_custom_call.1} parent=59 // pred_check
          %p498 = pneg %p200
        $region86: #{tpu_custom_call.1} parent=59 // pred_check_branch
          %500 = sbr.rel (%p498) target = $region88
        $region87: #{tpu_custom_call.1} parent=59 // pred_region
          %501 = dma.done [#allocation14], 1536
        $region88: #{tpu_custom_call.1} parent=59 // pred_fallthru
          _
        // Predicated region
        $region89: #{tpu_custom_call.1} parent=59 // pred_check
          %p502 = pneg %p221
        $region90: #{tpu_custom_call.1} parent=59 // pred_check_branch
          %504 = sbr.rel (%p502) target = $region92
        $region91: #{tpu_custom_call.1} parent=59 // pred_region
          %505 = dma.done [#allocation17], 3072
        $region92: #{tpu_custom_call.1} parent=59 // pred_fallthru
          _
        // Predicated region
        $region93: #{tpu_custom_call.1} parent=59 // pred_check
          %p506 = pneg %p242
        $region94: #{tpu_custom_call.1} parent=59 // pred_check_branch
          %508 = sbr.rel (%p506) target = $region96
        $region95: #{tpu_custom_call.1} parent=59 // pred_region
          %509 = dma.done [#allocation17], 512
        $region96: #{tpu_custom_call.1} parent=59 // pred_fallthru
          _
        // Predicated region
        $region97: #{tpu_custom_call.1} parent=59 // pred_check
          %p510 = pneg %p263
        $region98: #{tpu_custom_call.1} parent=59 // pred_check_branch
          %512 = sbr.rel (%p510) target = $region100
        $region99: #{tpu_custom_call.1} parent=59 // pred_region
          %513 = dma.done [#allocation20], 1024
        $region100: #{tpu_custom_call.1} parent=59 // pred_fallthru
          _
        %s514 = sand.u32 %s54, 1
        %s515 = scalar_lea.sflag [#allocation5], %s514
        %s516 = sand.u32 %s54, 1
        %s517 = smul.addr %s516, 64
        %s518 = scalar_lea.vmem [#allocation4], %s517
        %p519 = pneg %p67
        %p520 = pneg %p64
        %s521 = sand.u32 %s34, 1
        %s522 = scalar_lea.sflag [#allocation8], %s521
        %s523 = sand.u32 %s82, 1
        %s524 = smul.addr %s523, 64
        %s525 = scalar_lea.vmem [#allocation7], %s524
        %p526 = pneg %p95
        %p527 = pneg %p92
        %p528 = pneg %p116
        %p529 = pneg %p113
        %p530 = pneg %p137
        %p531 = pneg %p134
        %p532 = pneg %p158
        %p533 = pneg %p155
        %p534 = pneg %p179
        %p535 = pneg %p176
        %p536 = pneg %p200
        %p537 = pneg %p197
        %p538 = pneg %p221
        %p539 = pneg %p218
        %p540 = pneg %p242
        %p541 = pneg %p239
        %p542 = pneg %p263
        %p543 = pneg %p260
        %p544 = pneg %p291
        %p545 = pneg %p288
        %s546 = sand.u32 %s278, 1
        %s547 = scalar_lea.sflag [#allocation6], %s546
        %s548 = sand.u32 %s278, 1
        %s549 = smul.addr %s548, 64
        %s550 = scalar_lea.vmem [#allocation21], %s549
        %p552 = scmp.eq.s32.totalorder %s39, 0
        // Predicated region
        $region101: #{tpu_custom_call.1} parent=59 // pred_check
          %p553 = pneg %p552
        $region102: #{tpu_custom_call.1} parent=59 // pred_check_branch
          %555 = sbr.rel (%p553) target = $region104
        $region103: #{tpu_custom_call.1} parent=59 // pred_region
          %v556 = vld [vmem:[%s468] sm:$0xff]
          %v557 = vld [vmem:[%s468 + $0x8] sm:$0xff]
          %v558 = vld [vmem:[%s468 + $0x10] sm:$0xff]
          %v559 = vld [vmem:[%s468 + $0x18] sm:$0xff]
          %v560 = vld [vmem:[%s468 + $0x20] sm:$0xff]
          %v561 = vld [vmem:[%s468 + $0x28] sm:$0xff]
          %v562 = vld [vmem:[%s468 + $0x30] sm:$0xff]
          %v563 = vld [vmem:[%s468 + $0x38] sm:$0xff]
          %vm564 = vcmask 523264
          %v565 = vsel %vm564, %v556, 0.0
          %566 = vadd.xlane.f32.xlu0 %v565
          %v567 = vpop.xlane.xlu0 %566
          %v568 = vsel %vm564, %v557, 0.0
          %569 = vadd.xlane.f32.xlu0 %v568
          %v570 = vpop.xlane.xlu0 %569
          %v571 = vsel %vm564, %v558, 0.0
          %572 = vadd.xlane.f32.xlu0 %v571
          %v573 = vpop.xlane.xlu0 %572
          %v574 = vsel %vm564, %v559, 0.0
          %575 = vadd.xlane.f32.xlu0 %v574
          %v576 = vpop.xlane.xlu0 %575
          %v577 = vsel %vm564, %v560, 0.0
          %578 = vadd.xlane.f32.xlu0 %v577
          %v579 = vpop.xlane.xlu0 %578
          %v580 = vsel %vm564, %v561, 0.0
          %581 = vadd.xlane.f32.xlu0 %v580
          %v582 = vpop.xlane.xlu0 %581
          %v583 = vsel %vm564, %v562, 0.0
          %584 = vadd.xlane.f32.xlu0 %v583
          %v585 = vpop.xlane.xlu0 %584
          %v586 = vsel %vm564, %v563, 0.0
          %587 = vadd.xlane.f32.xlu0 %v586
          %v588 = vpop.xlane.xlu0 %587
          %v589 = vld [vmem:[#allocation9] sm:$0xff]
          %v590 = vld [vmem:[#allocation9 + $0x8] sm:$0xff]
          %v591 = vld [vmem:[#allocation9 + $0x10] sm:$0xff]
          %v592 = vld [vmem:[#allocation9 + $0x18] sm:$0xff]
          %v594 = vsel %vm564, %v589, 0
          %v597 = vsel %vm564, %v590, 0
          %v600 = vsel %vm564, %v591, 0
          %v603 = vsel %vm564, %v592, 0
          %605 = vmatprep.subr.mxu0 0.0
          %606 = vmatpush1.msra.mxu0 %v567
          %607 = vmatprep.subr.mxu0 0.0
          %608 = vmatpush1.msra.mxu0 %v570
          %609 = vmatprep.subr.mxu0 0.0
          %610 = vmatpush1.msra.mxu0 %v573
          %611 = vmatprep.subr.mxu0 0.0
          %612 = vmatpush1.msra.mxu0 %v576
          %613 = vmatprep.subr.mxu0 0.0
          %614 = vmatpush1.msra.mxu0 %v579
          %615 = vmatprep.subr.mxu0 0.0
          %616 = vmatpush1.msra.mxu0 %v582
          %617 = vmatprep.subr.mxu0 0.0
          %618 = vmatpush1.msra.mxu0 %v585
          %619 = vmatprep.subr.mxu0 0.0
          %620 = vmatpush1.msra.mxu0 %v588
          %621 = vmatprep.subr.mxu0 0.0
          %622 = vmatpush1.msra.mxu0 0.0
          %623 = vmatprep.subr.mxu0 0.0
          %624 = vmatpush1.msra.mxu0 0.0
          %625 = vmatprep.subr.mxu0 0.0
          %626 = vmatpush1.msra.mxu0 0.0
          %627 = vmatprep.subr.mxu0 0.0
          %628 = vmatpush1.msra.mxu0 0.0
          %629 = vmatprep.subr.mxu0 0.0
          %630 = vmatpush1.msra.mxu0 0.0
          %631 = vmatprep.subr.mxu0 0.0
          %632 = vmatpush1.msra.mxu0 0.0
          %633 = vmatprep.subr.mxu0 0.0
          %634 = vmatpush1.msra.mxu0 0.0
          %635 = vmatprep.subr.mxu0 0.0
          %636 = vmatpush1.msra.mxu0 0.0
          %637 = vmatprep.subr.mxu0 0.0
          %638 = vmatpush1.msra.mxu0 0.0
          %639 = vmatprep.subr.mxu0 0.0
          %640 = vmatpush1.msra.mxu0 0.0
          %641 = vmatprep.subr.mxu0 0.0
          %642 = vmatpush1.msra.mxu0 0.0
          %643 = vmatprep.subr.mxu0 0.0
          %644 = vmatpush1.msra.mxu0 0.0
          %645 = vmatprep.subr.mxu0 0.0
          %646 = vmatpush1.msra.mxu0 0.0
          %647 = vmatprep.subr.mxu0 0.0
          %648 = vmatpush1.msra.mxu0 0.0
          %649 = vmatprep.subr.mxu0 0.0
          %650 = vmatpush1.msra.mxu0 0.0
          %651 = vmatprep.subr.mxu0 0.0
          %652 = vmatpush1.msra.mxu0 0.0
          %653 = vmatprep.subr.mxu0 0.0
          %654 = vmatpush1.msra.mxu0 0.0
          %655 = vmatprep.subr.mxu0 0.0
          %656 = vmatpush1.msra.mxu0 0.0
          %657 = vmatprep.subr.mxu0 0.0
          %658 = vmatpush1.msra.mxu0 0.0
          %659 = vmatprep.subr.mxu0 0.0
          %660 = vmatpush1.msra.mxu0 0.0
          %661 = vmatprep.subr.mxu0 0.0
          %662 = vmatpush1.msra.mxu0 0.0
          %663 = vmatprep.subr.mxu0 0.0
          %664 = vmatpush1.msra.mxu0 0.0
          %665 = vmatprep.subr.mxu0 0.0
          %666 = vmatpush1.msra.mxu0 0.0
          %667 = vmatprep.subr.mxu0 0.0
          %668 = vmatpush1.msra.mxu0 0.0
          %669 = vmatprep.mubr.f32.mxu0 0.0
          %670 = vmatmul.mubr.f32.gmra.mrb[0].mxu0 %v594
          %v671 = vpop.f32.mrb[0].mxu0
          %v672 = vadd.f32 0.0, %v671
          %v673 = vpop.f32.mrb[0].mxu0
          %674 = vmatprep.mubr.f32.mxu0 0.0
          %675 = vmatmul.mubr.f32.gmra.mrb[0].mxu0 %v597
          %v676 = vpop.f32.mrb[0].mxu0
          %v677 = vadd.f32 0.0, %v676
          %v678 = vpop.f32.mrb[0].mxu0
          %679 = vmatprep.mubr.f32.mxu0 0.0
          %680 = vmatmul.mubr.f32.gmra.mrb[0].mxu0 %v600
          %v681 = vpop.f32.mrb[0].mxu0
          %v682 = vadd.f32 0.0, %v681
          %v683 = vpop.f32.mrb[0].mxu0
          %684 = vmatprep.mubr.f32.mxu0 0.0
          %685 = vmatmul.mubr.f32.gmra.mrb[0].mxu0 %v603
          %v686 = vpop.f32.mrb[0].mxu0
          %v687 = vadd.f32 0.0, %v686
          %v688 = vpop.f32.mrb[0].mxu0
          %689 = vdwg.mxu0
          %v690 = vmul.f32 %v672, 0.0078125
          %v691 = vmul.f32 %v677, 0.0078125
          %v692 = vmul.f32 %v682, 0.0078125
          %v693 = vmul.f32 %v687, 0.0078125
          %v694 = vld [vmem:[#allocation10] sm:$0xff]
          %v695 = vld [vmem:[#allocation10 + $0x8] sm:$0xff]
          %v696 = vld [vmem:[#allocation10 + $0x10] sm:$0xff]
          %v697 = vld [vmem:[#allocation10 + $0x18] sm:$0xff]
          %v698 = vld [vmem:[#allocation10 + $0x20] sm:$0xff]
          %v699 = vld [vmem:[#allocation10 + $0x28] sm:$0xff]
          %v700 = vld [vmem:[#allocation10 + $0x30] sm:$0xff]
          %v701 = vld [vmem:[#allocation10 + $0x38] sm:$0xff]
          %vm702 = vcmask 261120
          %v704 = vsel %vm702, %v694, 0
          %v707 = vsel %vm702, %v695, 0
          %v710 = vsel %vm702, %v696, 0
          %v713 = vsel %vm702, %v697, 0
          %v716 = vsel %vm702, %v698, 0
          %v719 = vsel %vm702, %v699, 0
          %v722 = vsel %vm702, %v700, 0
          %v725 = vsel %vm702, %v701, 0
          %727 = vmatprep.subr.mxu0 0.0
          %728 = vmatpush1.msra.mxu0 %v690
          %729 = vmatprep.subr.mxu0 0.0
          %730 = vmatpush1.msra.mxu0 %v691
          %731 = vmatprep.subr.mxu0 0.0
          %732 = vmatpush1.msra.mxu0 %v692
          %733 = vmatprep.subr.mxu0 0.0
          %734 = vmatpush1.msra.mxu0 %v693
          %735 = vmatprep.subr.mxu0 0.0
          %736 = vmatpush1.msra.mxu0 0.0
          %737 = vmatprep.subr.mxu0 0.0
          %738 = vmatpush1.msra.mxu0 0.0
          %739 = vmatprep.subr.mxu0 0.0
          %740 = vmatpush1.msra.mxu0 0.0
          %741 = vmatprep.subr.mxu0 0.0
          %742 = vmatpush1.msra.mxu0 0.0
          %743 = vmatprep.subr.mxu0 0.0
          %744 = vmatpush1.msra.mxu0 0.0
          %745 = vmatprep.subr.mxu0 0.0
          %746 = vmatpush1.msra.mxu0 0.0
          %747 = vmatprep.subr.mxu0 0.0
          %748 = vmatpush1.msra.mxu0 0.0
          %749 = vmatprep.subr.mxu0 0.0
          %750 = vmatpush1.msra.mxu0 0.0
          %751 = vmatprep.subr.mxu0 0.0
          %752 = vmatpush1.msra.mxu0 0.0
          %753 = vmatprep.subr.mxu0 0.0
          %754 = vmatpush1.msra.mxu0 0.0
          %755 = vmatprep.subr.mxu0 0.0
          %756 = vmatpush1.msra.mxu0 0.0
          %757 = vmatprep.subr.mxu0 0.0
          %758 = vmatpush1.msra.mxu0 0.0
          %759 = vmatprep.subr.mxu0 0.0
          %760 = vmatpush1.msra.mxu0 0.0
          %761 = vmatprep.subr.mxu0 0.0
          %762 = vmatpush1.msra.mxu0 0.0
          %763 = vmatprep.subr.mxu0 0.0
          %764 = vmatpush1.msra.mxu0 0.0
          %765 = vmatprep.subr.mxu0 0.0
          %766 = vmatpush1.msra.mxu0 0.0
          %767 = vmatprep.subr.mxu0 0.0
          %768 = vmatpush1.msra.mxu0 0.0
          %769 = vmatprep.subr.mxu0 0.0
          %770 = vmatpush1.msra.mxu0 0.0
          %771 = vmatprep.subr.mxu0 0.0
          %772 = vmatpush1.msra.mxu0 0.0
          %773 = vmatprep.subr.mxu0 0.0
          %774 = vmatpush1.msra.mxu0 0.0
          %775 = vmatprep.subr.mxu0 0.0
          %776 = vmatpush1.msra.mxu0 0.0
          %777 = vmatprep.subr.mxu0 0.0
          %778 = vmatpush1.msra.mxu0 0.0
          %779 = vmatprep.subr.mxu0 0.0
          %780 = vmatpush1.msra.mxu0 0.0
          %781 = vmatprep.subr.mxu0 0.0
          %782 = vmatpush1.msra.mxu0 0.0
          %783 = vmatprep.subr.mxu0 0.0
          %784 = vmatpush1.msra.mxu0 0.0
          %785 = vmatprep.subr.mxu0 0.0
          %786 = vmatpush1.msra.mxu0 0.0
          %787 = vmatprep.subr.mxu0 0.0
          %788 = vmatpush1.msra.mxu0 0.0
          %789 = vmatprep.subr.mxu0 0.0
          %790 = vmatpush1.msra.mxu0 0.0
          %791 = vmatprep.mubr.f32.mxu0 0.0
          %792 = vmatmul.mubr.f32.gmra.mrb[0].mxu0 %v704
          %v793 = vpop.f32.mrb[0].mxu0
          %v794 = vadd.f32 0.0, %v793
          %v795 = vpop.f32.mrb[0].mxu0
          %796 = vmatprep.mubr.f32.mxu0 0.0
          %797 = vmatmul.mubr.f32.gmra.mrb[0].mxu0 %v707
          %v798 = vpop.f32.mrb[0].mxu0
          %v799 = vadd.f32 0.0, %v798
          %v800 = vpop.f32.mrb[0].mxu0
          %801 = vmatprep.mubr.f32.mxu0 0.0
          %802 = vmatmul.mubr.f32.gmra.mrb[0].mxu0 %v710
          %v803 = vpop.f32.mrb[0].mxu0
          %v804 = vadd.f32 0.0, %v803
          %v805 = vpop.f32.mrb[0].mxu0
          %806 = vmatprep.mubr.f32.mxu0 0.0
          %807 = vmatmul.mubr.f32.gmra.mrb[0].mxu0 %v713
          %v808 = vpop.f32.mrb[0].mxu0
          %v809 = vadd.f32 0.0, %v808
          %v810 = vpop.f32.mrb[0].mxu0
          %811 = vmatprep.mubr.f32.mxu0 0.0
          %812 = vmatmul.mubr.f32.gmra.mrb[0].mxu0 %v716
          %v813 = vpop.f32.mrb[0].mxu0
          %v814 = vadd.f32 0.0, %v813
          %v815 = vpop.f32.mrb[0].mxu0
          %816 = vmatprep.mubr.f32.mxu0 0.0
          %817 = vmatmul.mubr.f32.gmra.mrb[0].mxu0 %v719
          %v818 = vpop.f32.mrb[0].mxu0
          %v819 = vadd.f32 0.0, %v818
          %v820 = vpop.f32.mrb[0].mxu0
          %821 = vmatprep.mubr.f32.mxu0 0.0
          %822 = vmatmul.mubr.f32.gmra.mrb[0].mxu0 %v722
          %v823 = vpop.f32.mrb[0].mxu0
          %v824 = vadd.f32 0.0, %v823
          %v825 = vpop.f32.mrb[0].mxu0
          %826 = vmatprep.mubr.f32.mxu0 0.0
          %827 = vmatmul.mubr.f32.gmra.mrb[0].mxu0 %v725
          %v828 = vpop.f32.mrb[0].mxu0
          %v829 = vadd.f32 0.0, %v828
          %v830 = vpop.f32.mrb[0].mxu0
          %831 = vdwg.mxu0
          %833 = vset.pattern.permute.xlu0 0
          %834 = vperm.xlu0 %833, %v794
          %v835 = vpop.permute.xlu0 %834
          %838 = vset.pattern.permute.xlu0 0
          %839 = vperm.xlu0 %838, %v799
          %v840 = vpop.permute.xlu0 %839
          %843 = vset.pattern.permute.xlu0 0
          %844 = vperm.xlu0 %843, %v804
          %v845 = vpop.permute.xlu0 %844
          %848 = vset.pattern.permute.xlu0 0
          %849 = vperm.xlu0 %848, %v809
          %v850 = vpop.permute.xlu0 %849
          %853 = vset.pattern.permute.xlu0 0
          %854 = vperm.xlu0 %853, %v814
          %v855 = vpop.permute.xlu0 %854
          %858 = vset.pattern.permute.xlu0 0
          %859 = vperm.xlu0 %858, %v819
          %v860 = vpop.permute.xlu0 %859
          %863 = vset.pattern.permute.xlu0 0
          %864 = vperm.xlu0 %863, %v824
          %v865 = vpop.permute.xlu0 %864
          %868 = vset.pattern.permute.xlu0 0
          %869 = vperm.xlu0 %868, %v829
          %v870 = vpop.permute.xlu0 %869
          %v872 = vsub.f32 %v556, %v835
          %v873 = vsub.f32 %v557, %v840
          %v874 = vsub.f32 %v558, %v845
          %v875 = vsub.f32 %v559, %v850
          %v876 = vsub.f32 %v560, %v855
          %v877 = vsub.f32 %v561, %v860
          %v878 = vsub.f32 %v562, %v865
          %v879 = vsub.f32 %v563, %v870
          %v880 = vmul.f32 %v872, %v872
          %v881 = vmul.f32 %v873, %v873
          %v882 = vmul.f32 %v874, %v874
          %v883 = vmul.f32 %v875, %v875
          %v884 = vmul.f32 %v876, %v876
          %v885 = vmul.f32 %v877, %v877
          %v886 = vmul.f32 %v878, %v878
          %v887 = vmul.f32 %v879, %v879
          %v888 = vsel %vm564, %v880, 0.0
          %889 = vadd.xlane.f32.xlu0 %v888
          %v890 = vpop.xlane.xlu0 %889
          %v891 = vsel %vm564, %v881, 0.0
          %892 = vadd.xlane.f32.xlu0 %v891
          %v893 = vpop.xlane.xlu0 %892
          %v894 = vsel %vm564, %v882, 0.0
          %895 = vadd.xlane.f32.xlu0 %v894
          %v896 = vpop.xlane.xlu0 %895
          %v897 = vsel %vm564, %v883, 0.0
          %898 = vadd.xlane.f32.xlu0 %v897
          %v899 = vpop.xlane.xlu0 %898
          %v900 = vsel %vm564, %v884, 0.0
          %901 = vadd.xlane.f32.xlu0 %v900
          %v902 = vpop.xlane.xlu0 %901
          %v903 = vsel %vm564, %v885, 0.0
          %904 = vadd.xlane.f32.xlu0 %v903
          %v905 = vpop.xlane.xlu0 %904
          %v906 = vsel %vm564, %v886, 0.0
          %907 = vadd.xlane.f32.xlu0 %v906
          %v908 = vpop.xlane.xlu0 %907
          %v909 = vsel %vm564, %v887, 0.0
          %910 = vadd.xlane.f32.xlu0 %v909
          %v911 = vpop.xlane.xlu0 %910
          %912 = vmatprep.subr.mxu0 0.0
          %913 = vmatpush1.msra.mxu0 %v890
          %914 = vmatprep.subr.mxu0 0.0
          %915 = vmatpush1.msra.mxu0 %v893
          %916 = vmatprep.subr.mxu0 0.0
          %917 = vmatpush1.msra.mxu0 %v896
          %918 = vmatprep.subr.mxu0 0.0
          %919 = vmatpush1.msra.mxu0 %v899
          %920 = vmatprep.subr.mxu0 0.0
          %921 = vmatpush1.msra.mxu0 %v902
          %922 = vmatprep.subr.mxu0 0.0
          %923 = vmatpush1.msra.mxu0 %v905
          %924 = vmatprep.subr.mxu0 0.0
          %925 = vmatpush1.msra.mxu0 %v908
          %926 = vmatprep.subr.mxu0 0.0
          %927 = vmatpush1.msra.mxu0 %v911
          %928 = vmatprep.subr.mxu0 0.0
          %929 = vmatpush1.msra.mxu0 0.0
          %930 = vmatprep.subr.mxu0 0.0
          %931 = vmatpush1.msra.mxu0 0.0
          %932 = vmatprep.subr.mxu0 0.0
          %933 = vmatpush1.msra.mxu0 0.0
          %934 = vmatprep.subr.mxu0 0.0
          %935 = vmatpush1.msra.mxu0 0.0
          %936 = vmatprep.subr.mxu0 0.0
          %937 = vmatpush1.msra.mxu0 0.0
          %938 = vmatprep.subr.mxu0 0.0
          %939 = vmatpush1.msra.mxu0 0.0
          %940 = vmatprep.subr.mxu0 0.0
          %941 = vmatpush1.msra.mxu0 0.0
          %942 = vmatprep.subr.mxu0 0.0
          %943 = vmatpush1.msra.mxu0 0.0
          %944 = vmatprep.subr.mxu0 0.0
          %945 = vmatpush1.msra.mxu0 0.0
          %946 = vmatprep.subr.mxu0 0.0
          %947 = vmatpush1.msra.mxu0 0.0
          %948 = vmatprep.subr.mxu0 0.0
          %949 = vmatpush1.msra.mxu0 0.0
          %950 = vmatprep.subr.mxu0 0.0
          %951 = vmatpush1.msra.mxu0 0.0
          %952 = vmatprep.subr.mxu0 0.0
          %953 = vmatpush1.msra.mxu0 0.0
          %954 = vmatprep.subr.mxu0 0.0
          %955 = vmatpush1.msra.mxu0 0.0
          %956 = vmatprep.subr.mxu0 0.0
          %957 = vmatpush1.msra.mxu0 0.0
          %958 = vmatprep.subr.mxu0 0.0
          %959 = vmatpush1.msra.mxu0 0.0
          %960 = vmatprep.subr.mxu0 0.0
          %961 = vmatpush1.msra.mxu0 0.0
          %962 = vmatprep.subr.mxu0 0.0
          %963 = vmatpush1.msra.mxu0 0.0
          %964 = vmatprep.subr.mxu0 0.0
          %965 = vmatpush1.msra.mxu0 0.0
          %966 = vmatprep.subr.mxu0 0.0
          %967 = vmatpush1.msra.mxu0 0.0
          %968 = vmatprep.subr.mxu0 0.0
          %969 = vmatpush1.msra.mxu0 0.0
          %970 = vmatprep.subr.mxu0 0.0
          %971 = vmatpush1.msra.mxu0 0.0
          %972 = vmatprep.subr.mxu0 0.0
          %973 = vmatpush1.msra.mxu0 0.0
          %974 = vmatprep.subr.mxu0 0.0
          %975 = vmatpush1.msra.mxu0 0.0
          %976 = vmatprep.mubr.f32.mxu0 0.0
          %977 = vmatmul.mubr.f32.gmra.mrb[0].mxu0 %v594
          %v978 = vpop.f32.mrb[0].mxu0
          %v979 = vadd.f32 0.0, %v978
          %v980 = vpop.f32.mrb[0].mxu0
          %981 = vmatprep.mubr.f32.mxu0 0.0
          %982 = vmatmul.mubr.f32.gmra.mrb[0].mxu0 %v597
          %v983 = vpop.f32.mrb[0].mxu0
          %v984 = vadd.f32 0.0, %v983
          %v985 = vpop.f32.mrb[0].mxu0
          %986 = vmatprep.mubr.f32.mxu0 0.0
          %987 = vmatmul.mubr.f32.gmra.mrb[0].mxu0 %v600
          %v988 = vpop.f32.mrb[0].mxu0
          %v989 = vadd.f32 0.0, %v988
          %v990 = vpop.f32.mrb[0].mxu0
          %991 = vmatprep.mubr.f32.mxu0 0.0
          %992 = vmatmul.mubr.f32.gmra.mrb[0].mxu0 %v603
          %v993 = vpop.f32.mrb[0].mxu0
          %v994 = vadd.f32 0.0, %v993
          %v995 = vpop.f32.mrb[0].mxu0
          %996 = vdwg.mxu0
          %v997 = vmul.f32 %v979, 0.0078125
          %v998 = vmul.f32 %v984, 0.0078125
          %v999 = vmul.f32 %v989, 0.0078125
          %v1000 = vmul.f32 %v994, 0.0078125
          %v1001 = vadd.f32 %v997, 1e-05
          %v1002 = vadd.f32 %v998, 1e-05
          %v1003 = vadd.f32 %v999, 1e-05
          %v1004 = vadd.f32 %v1000, 1e-05
          %v1005 = vrsqrt.pop %v1001
          %v1006 = vrsqrt.pop %v1002
          %v1007 = vrsqrt.pop %v1003
          %v1008 = vrsqrt.pop %v1004
          %1009 = vmatprep.subr.mxu0 0.0
          %1010 = vmatpush1.msra.mxu0 %v1005
          %1011 = vmatprep.subr.mxu0 0.0
          %1012 = vmatpush1.msra.mxu0 %v1006
          %1013 = vmatprep.subr.mxu0 0.0
          %1014 = vmatpush1.msra.mxu0 %v1007
          %1015 = vmatprep.subr.mxu0 0.0
          %1016 = vmatpush1.msra.mxu0 %v1008
          %1017 = vmatprep.subr.mxu0 0.0
          %1018 = vmatpush1.msra.mxu0 0.0
          %1019 = vmatprep.subr.mxu0 0.0
          %1020 = vmatpush1.msra.mxu0 0.0
          %1021 = vmatprep.subr.mxu0 0.0
          %1022 = vmatpush1.msra.mxu0 0.0
          %1023 = vmatprep.subr.mxu0 0.0
          %1024 = vmatpush1.msra.mxu0 0.0
          %1025 = vmatprep.subr.mxu0 0.0
          %1026 = vmatpush1.msra.mxu0 0.0
          %1027 = vmatprep.subr.mxu0 0.0
          %1028 = vmatpush1.msra.mxu0 0.0
          %1029 = vmatprep.subr.mxu0 0.0
          %1030 = vmatpush1.msra.mxu0 0.0
          %1031 = vmatprep.subr.mxu0 0.0
          %1032 = vmatpush1.msra.mxu0 0.0
          %1033 = vmatprep.subr.mxu0 0.0
          %1034 = vmatpush1.msra.mxu0 0.0
          %1035 = vmatprep.subr.mxu0 0.0
          %1036 = vmatpush1.msra.mxu0 0.0
          %1037 = vmatprep.subr.mxu0 0.0
          %1038 = vmatpush1.msra.mxu0 0.0
          %1039 = vmatprep.subr.mxu0 0.0
          %1040 = vmatpush1.msra.mxu0 0.0
          %1041 = vmatprep.subr.mxu0 0.0
          %1042 = vmatpush1.msra.mxu0 0.0
          %1043 = vmatprep.subr.mxu0 0.0
          %1044 = vmatpush1.msra.mxu0 0.0
          %1045 = vmatprep.subr.mxu0 0.0
          %1046 = vmatpush1.msra.mxu0 0.0
          %1047 = vmatprep.subr.mxu0 0.0
          %1048 = vmatpush1.msra.mxu0 0.0
          %1049 = vmatprep.subr.mxu0 0.0
          %1050 = vmatpush1.msra.mxu0 0.0
          %1051 = vmatprep.subr.mxu0 0.0
          %1052 = vmatpush1.msra.mxu0 0.0
          %1053 = vmatprep.subr.mxu0 0.0
          %1054 = vmatpush1.msra.mxu0 0.0
          %1055 = vmatprep.subr.mxu0 0.0
          %1056 = vmatpush1.msra.mxu0 0.0
          %1057 = vmatprep.subr.mxu0 0.0
          %1058 = vmatpush1.msra.mxu0 0.0
          %1059 = vmatprep.subr.mxu0 0.0
          %1060 = vmatpush1.msra.mxu0 0.0
          %1061 = vmatprep.subr.mxu0 0.0
          %1062 = vmatpush1.msra.mxu0 0.0
          %1063 = vmatprep.subr.mxu0 0.0
          %1064 = vmatpush1.msra.mxu0 0.0
          %1065 = vmatprep.subr.mxu0 0.0
          %1066 = vmatpush1.msra.mxu0 0.0
          %1067 = vmatprep.subr.mxu0 0.0
          %1068 = vmatpush1.msra.mxu0 0.0
          %1069 = vmatprep.subr.mxu0 0.0
          %1070 = vmatpush1.msra.mxu0 0.0
          %1071 = vmatprep.subr.mxu0 0.0
          %1072 = vmatpush1.msra.mxu0 0.0
          %1073 = vmatprep.mubr.f32.mxu0 0.0
          %1074 = vmatmul.mubr.f32.gmra.mrb[0].mxu0 %v704
          %v1075 = vpop.f32.mrb[0].mxu0
          %v1076 = vadd.f32 0.0, %v1075
          %v1077 = vpop.f32.mrb[0].mxu0
          %1078 = vmatprep.mubr.f32.mxu0 0.0
          %1079 = vmatmul.mubr.f32.gmra.mrb[0].mxu0 %v707
          %v1080 = vpop.f32.mrb[0].mxu0
          %v1081 = vadd.f32 0.0, %v1080
          %v1082 = vpop.f32.mrb[0].mxu0
          %1083 = vmatprep.mubr.f32.mxu0 0.0
          %1084 = vmatmul.mubr.f32.gmra.mrb[0].mxu0 %v710
          %v1085 = vpop.f32.mrb[0].mxu0
          %v1086 = vadd.f32 0.0, %v1085
          %v1087 = vpop.f32.mrb[0].mxu0
          %1088 = vmatprep.mubr.f32.mxu0 0.0
          %1089 = vmatmul.mubr.f32.gmra.mrb[0].mxu0 %v713
          %v1090 = vpop.f32.mrb[0].mxu0
          %v1091 = vadd.f32 0.0, %v1090
          %v1092 = vpop.f32.mrb[0].mxu0
          %1093 = vmatprep.mubr.f32.mxu0 0.0
          %1094 = vmatmul.mubr.f32.gmra.mrb[0].mxu0 %v716
          %v1095 = vpop.f32.mrb[0].mxu0
          %v1096 = vadd.f32 0.0, %v1095
          %v1097 = vpop.f32.mrb[0].mxu0
          %1098 = vmatprep.mubr.f32.mxu0 0.0
          %1099 = vmatmul.mubr.f32.gmra.mrb[0].mxu0 %v719
          %v1100 = vpop.f32.mrb[0].mxu0
          %v1101 = vadd.f32 0.0, %v1100
          %v1102 = vpop.f32.mrb[0].mxu0
          %1103 = vmatprep.mubr.f32.mxu0 0.0
          %1104 = vmatmul.mubr.f32.gmra.mrb[0].mxu0 %v722
          %v1105 = vpop.f32.mrb[0].mxu0
          %v1106 = vadd.f32 0.0, %v1105
          %v1107 = vpop.f32.mrb[0].mxu0
          %1108 = vmatprep.mubr.f32.mxu0 0.0
          %1109 = vmatmul.mubr.f32.gmra.mrb[0].mxu0 %v725
          %v1110 = vpop.f32.mrb[0].mxu0
          %v1111 = vadd.f32 0.0, %v1110
          %v1112 = vpop.f32.mrb[0].mxu0
          %1113 = vdwg.mxu0
          %1115 = vset.pattern.permute.xlu0 0
          %1116 = vperm.xlu0 %1115, %v1076
          %v1117 = vpop.permute.xlu0 %1116
          %1120 = vset.pattern.permute.xlu0 0
          %1121 = vperm.xlu0 %1120, %v1081
          %v1122 = vpop.permute.xlu0 %1121
          %1125 = vset.pattern.permute.xlu0 0
          %1126 = vperm.xlu0 %1125, %v1086
          %v1127 = vpop.permute.xlu0 %1126
          %1130 = vset.pattern.permute.xlu0 0
          %1131 = vperm.xlu0 %1130, %v1091
          %v1132 = vpop.permute.xlu0 %1131
          %1135 = vset.pattern.permute.xlu0 0
          %1136 = vperm.xlu0 %1135, %v1096
          %v1137 = vpop.permute.xlu0 %1136
          %1140 = vset.pattern.permute.xlu0 0
          %1141 = vperm.xlu0 %1140, %v1101
          %v1142 = vpop.permute.xlu0 %1141
          %1145 = vset.pattern.permute.xlu0 0
          %1146 = vperm.xlu0 %1145, %v1106
          %v1147 = vpop.permute.xlu0 %1146
          %1150 = vset.pattern.permute.xlu0 0
          %1151 = vperm.xlu0 %1150, %v1111
          %v1152 = vpop.permute.xlu0 %1151
          %v1154 = vmul.f32 %v872, %v1117
          %v1155 = vmul.f32 %v873, %v1122
          %v1156 = vmul.f32 %v874, %v1127
          %v1157 = vmul.f32 %v875, %v1132
          %v1158 = vmul.f32 %v876, %v1137
          %v1159 = vmul.f32 %v877, %v1142
          %v1160 = vmul.f32 %v878, %v1147
          %v1161 = vmul.f32 %v879, %v1152
          %v1162 = vld [vmem:[#allocation12] sm:$0xff]
          %v1163 = vld [vmem:[#allocation12 + $0x8] sm:$0xff]
          %v1164 = vld [vmem:[#allocation12 + $0x10] sm:$0xff]
          %v1165 = vld [vmem:[#allocation12 + $0x18] sm:$0xff]
          %v1166 = vld [vmem:[#allocation12 + $0x20] sm:$0xff]
          %v1167 = vld [vmem:[#allocation12 + $0x28] sm:$0xff]
          %v1168 = vld [vmem:[#allocation12 + $0x30] sm:$0xff]
          %v1169 = vld [vmem:[#allocation12 + $0x38] sm:$0xff]
          %1171 = vset.pattern.permute.xlu0 0
          %1172 = vperm.xlu0 %1171, %v1162
          %v1173 = vpop.permute.xlu0 %1172
          %1176 = vset.pattern.permute.xlu0 0
          %1177 = vperm.xlu0 %1176, %v1163
          %v1178 = vpop.permute.xlu0 %1177
          %1181 = vset.pattern.permute.xlu0 0
          %1182 = vperm.xlu0 %1181, %v1164
          %v1183 = vpop.permute.xlu0 %1182
          %1186 = vset.pattern.permute.xlu0 0
          %1187 = vperm.xlu0 %1186, %v1165
          %v1188 = vpop.permute.xlu0 %1187
          %1191 = vset.pattern.permute.xlu0 0
          %1192 = vperm.xlu0 %1191, %v1166
          %v1193 = vpop.permute.xlu0 %1192
          %1196 = vset.pattern.permute.xlu0 0
          %1197 = vperm.xlu0 %1196, %v1167
          %v1198 = vpop.permute.xlu0 %1197
          %1201 = vset.pattern.permute.xlu0 0
          %1202 = vperm.xlu0 %1201, %v1168
          %v1203 = vpop.permute.xlu0 %1202
          %1206 = vset.pattern.permute.xlu0 0
          %1207 = vperm.xlu0 %1206, %v1169
          %v1208 = vpop.permute.xlu0 %1207
          %v1210 = vmul.f32 %v1154, %v1173
          %v1211 = vmul.f32 %v1155, %v1178
          %v1212 = vmul.f32 %v1156, %v1183
          %v1213 = vmul.f32 %v1157, %v1188
          %v1214 = vmul.f32 %v1158, %v1193
          %v1215 = vmul.f32 %v1159, %v1198
          %v1216 = vmul.f32 %v1160, %v1203
          %v1217 = vmul.f32 %v1161, %v1208
          %v1218 = vld [vmem:[#allocation13] sm:$0xff]
          %v1219 = vld [vmem:[#allocation13 + $0x8] sm:$0xff]
          %v1220 = vld [vmem:[#allocation13 + $0x10] sm:$0xff]
          %v1221 = vld [vmem:[#allocation13 + $0x18] sm:$0xff]
          %v1222 = vld [vmem:[#allocation13 + $0x20] sm:$0xff]
          %v1223 = vld [vmem:[#allocation13 + $0x28] sm:$0xff]
          %v1224 = vld [vmem:[#allocation13 + $0x30] sm:$0xff]
          %v1225 = vld [vmem:[#allocation13 + $0x38] sm:$0xff]
          %1227 = vset.pattern.permute.xlu0 0
          %1228 = vperm.xlu0 %1227, %v1218
          %v1229 = vpop.permute.xlu0 %1228
          %1232 = vset.pattern.permute.xlu0 0
          %1233 = vperm.xlu0 %1232, %v1219
          %v1234 = vpop.permute.xlu0 %1233
          %1237 = vset.pattern.permute.xlu0 0
          %1238 = vperm.xlu0 %1237, %v1220
          %v1239 = vpop.permute.xlu0 %1238
          %1242 = vset.pattern.permute.xlu0 0
          %1243 = vperm.xlu0 %1242, %v1221
          %v1244 = vpop.permute.xlu0 %1243
          %1247 = vset.pattern.permute.xlu0 0
          %1248 = vperm.xlu0 %1247, %v1222
          %v1249 = vpop.permute.xlu0 %1248
          %1252 = vset.pattern.permute.xlu0 0
          %1253 = vperm.xlu0 %1252, %v1223
          %v1254 = vpop.permute.xlu0 %1253
          %1257 = vset.pattern.permute.xlu0 0
          %1258 = vperm.xlu0 %1257, %v1224
          %v1259 = vpop.permute.xlu0 %1258
          %1262 = vset.pattern.permute.xlu0 0
          %1263 = vperm.xlu0 %1262, %v1225
          %v1264 = vpop.permute.xlu0 %1263
          %v1266 = vadd.f32 %v1210, %v1229
          %v1267 = vadd.f32 %v1211, %v1234
          %v1268 = vadd.f32 %v1212, %v1239
          %v1269 = vadd.f32 %v1213, %v1244
          %v1270 = vadd.f32 %v1214, %v1249
          %v1271 = vadd.f32 %v1215, %v1254
          %v1272 = vadd.f32 %v1216, %v1259
          %v1273 = vadd.f32 %v1217, %v1264
          %v1274 = vpack.c.bf16 %v1267, %v1266
          %v1275 = vpack.c.bf16 %v1269, %v1268
          %v1276 = vpack.c.bf16 %v1271, %v1270
          %v1277 = vpack.c.bf16 %v1273, %v1272
          %v1278 = vld [vmem:[#allocation15] sm:$0xf]
          %v1279 = vld [vmem:[#allocation15 + $0x4] sm:$0xf]
          %v1280 = vld [vmem:[#allocation15 + $0x8] sm:$0xf]
          %v1281 = vld [vmem:[#allocation15 + $0xc] sm:$0xf]
          %v1282 = vld [vmem:[#allocation15 + $0x10] sm:$0xf]
          %v1283 = vld [vmem:[#allocation15 + $0x14] sm:$0xf]
          %v1284 = vld [vmem:[#allocation15 + $0x18] sm:$0xf]
          %v1285 = vld [vmem:[#allocation15 + $0x1c] sm:$0xf]
          %v1286 = vld [vmem:[#allocation15 + $0x20] sm:$0xf]
          %v1287 = vld [vmem:[#allocation15 + $0x24] sm:$0xf]
          %v1288 = vld [vmem:[#allocation15 + $0x28] sm:$0xf]
          %v1289 = vld [vmem:[#allocation15 + $0x2c] sm:$0xf]
          %v1290 = vld [vmem:[#allocation15 + $0x30] sm:$0xf]
          %v1291 = vld [vmem:[#allocation15 + $0x34] sm:$0xf]
          %v1292 = vld [vmem:[#allocation15 + $0x38] sm:$0xf]
          %v1293 = vld [vmem:[#allocation15 + $0x3c] sm:$0xf]
          %v1294 = vld [vmem:[#allocation15 + $0x40] sm:$0xf]
          %v1295 = vld [vmem:[#allocation15 + $0x44] sm:$0xf]
          %v1296 = vld [vmem:[#allocation15 + $0x48] sm:$0xf]
          %v1297 = vld [vmem:[#allocation15 + $0x4c] sm:$0xf]
          %v1298 = vld [vmem:[#allocation15 + $0x50] sm:$0xf]
          %v1299 = vld [vmem:[#allocation15 + $0x54] sm:$0xf]
          %v1300 = vld [vmem:[#allocation15 + $0x58] sm:$0xf]
          %v1301 = vld [vmem:[#allocation15 + $0x5c] sm:$0xf]
          %v1302 = vld [vmem:[#allocation16] sm:$0xff]
          %v1303 = vld [vmem:[#allocation16 + $0x8] sm:$0xff]
          %v1304 = vld [vmem:[#allocation16 + $0x10] sm:$0xff]
          %v1305 = vld [vmem:[#allocation16 + $0x18] sm:$0xff]
          %v1306 = vld [vmem:[#allocation16 + $0x20] sm:$0xff]
          %v1307 = vld [vmem:[#allocation16 + $0x28] sm:$0xff]
          %v1308 = vld [vmem:[#allocation16 + $0x30] sm:$0xff]
          %v1309 = vld [vmem:[#allocation16 + $0x38] sm:$0xff]
          %v1310 = vld [vmem:[#allocation16 + $0x40] sm:$0xff]
          %v1311 = vld [vmem:[#allocation16 + $0x48] sm:$0xff]
          %v1312 = vld [vmem:[#allocation16 + $0x50] sm:$0xff]
          %v1313 = vld [vmem:[#allocation16 + $0x58] sm:$0xff]
          %v1314 = vld [vmem:[#allocation16 + $0x60] sm:$0xff]
          %v1315 = vld [vmem:[#allocation16 + $0x68] sm:$0xff]
          %v1316 = vld [vmem:[#allocation16 + $0x70] sm:$0xff]
          %v1317 = vld [vmem:[#allocation16 + $0x78] sm:$0xff]
          %v1318 = vld [vmem:[#allocation16 + $0x80] sm:$0xff]
          %v1319 = vld [vmem:[#allocation16 + $0x88] sm:$0xff]
          %v1320 = vld [vmem:[#allocation16 + $0x90] sm:$0xff]
          %v1321 = vld [vmem:[#allocation16 + $0x98] sm:$0xff]
          %v1322 = vld [vmem:[#allocation16 + $0xa0] sm:$0xff]
          %v1323 = vld [vmem:[#allocation16 + $0xa8] sm:$0xff]
          %v1324 = vld [vmem:[#allocation16 + $0xb0] sm:$0xff]
          %v1325 = vld [vmem:[#allocation16 + $0xb8] sm:$0xff]
          %1327 = vset.pattern.permute.xlu0 0
          %1328 = vperm.xlu0 %1327, %v1302
          %v1329 = vpop.permute.xlu0 %1328
          %1332 = vset.pattern.permute.xlu0 0
          %1333 = vperm.xlu0 %1332, %v1303
          %v1334 = vpop.permute.xlu0 %1333
          %1337 = vset.pattern.permute.xlu0 0
          %1338 = vperm.xlu0 %1337, %v1304
          %v1339 = vpop.permute.xlu0 %1338
          %1342 = vset.pattern.permute.xlu0 0
          %1343 = vperm.xlu0 %1342, %v1305
          %v1344 = vpop.permute.xlu0 %1343
          %1347 = vset.pattern.permute.xlu0 0
          %1348 = vperm.xlu0 %1347, %v1306
          %v1349 = vpop.permute.xlu0 %1348
          %1352 = vset.pattern.permute.xlu0 0
          %1353 = vperm.xlu0 %1352, %v1307
          %v1354 = vpop.permute.xlu0 %1353
          %1357 = vset.pattern.permute.xlu0 0
          %1358 = vperm.xlu0 %1357, %v1308
          %v1359 = vpop.permute.xlu0 %1358
          %1362 = vset.pattern.permute.xlu0 0
          %1363 = vperm.xlu0 %1362, %v1309
          %v1364 = vpop.permute.xlu0 %1363
          %1367 = vset.pattern.permute.xlu0 0
          %1368 = vperm.xlu0 %1367, %v1310
          %v1369 = vpop.permute.xlu0 %1368
          %1372 = vset.pattern.permute.xlu0 0
          %1373 = vperm.xlu0 %1372, %v1311
          %v1374 = vpop.permute.xlu0 %1373
          %1377 = vset.pattern.permute.xlu0 0
          %1378 = vperm.xlu0 %1377, %v1312
          %v1379 = vpop.permute.xlu0 %1378
          %1382 = vset.pattern.permute.xlu0 0
          %1383 = vperm.xlu0 %1382, %v1313
          %v1384 = vpop.permute.xlu0 %1383
          %1387 = vset.pattern.permute.xlu0 0
          %1388 = vperm.xlu0 %1387, %v1314
          %v1389 = vpop.permute.xlu0 %1388
          %1392 = vset.pattern.permute.xlu0 0
          %1393 = vperm.xlu0 %1392, %v1315
          %v1394 = vpop.permute.xlu0 %1393
          %1397 = vset.pattern.permute.xlu0 0
          %1398 = vperm.xlu0 %1397, %v1316
          %v1399 = vpop.permute.xlu0 %1398
          %1402 = vset.pattern.permute.xlu0 0
          %1403 = vperm.xlu0 %1402, %v1317
          %v1404 = vpop.permute.xlu0 %1403
          %1407 = vset.pattern.permute.xlu0 0
          %1408 = vperm.xlu0 %1407, %v1318
          %v1409 = vpop.permute.xlu0 %1408
          %1412 = vset.pattern.permute.xlu0 0
          %1413 = vperm.xlu0 %1412, %v1319
          %v1414 = vpop.permute.xlu0 %1413
          %1417 = vset.pattern.permute.xlu0 0
          %1418 = vperm.xlu0 %1417, %v1320
          %v1419 = vpop.permute.xlu0 %1418
          %1422 = vset.pattern.permute.xlu0 0
          %1423 = vperm.xlu0 %1422, %v1321
          %v1424 = vpop.permute.xlu0 %1423
          %1427 = vset.pattern.permute.xlu0 0
          %1428 = vperm.xlu0 %1427, %v1322
          %v1429 = vpop.permute.xlu0 %1428
          %1432 = vset.pattern.permute.xlu0 0
          %1433 = vperm.xlu0 %1432, %v1323
          %v1434 = vpop.permute.xlu0 %1433
          %1437 = vset.pattern.permute.xlu0 0
          %1438 = vperm.xlu0 %1437, %v1324
          %v1439 = vpop.permute.xlu0 %1438
          %1442 = vset.pattern.permute.xlu0 0
          %1443 = vperm.xlu0 %1442, %v1325
          %v1444 = vpop.permute.xlu0 %1443
          %v1470 = vunpack.c.l.b16 %v1278
          %v1471 = vunpack.c.l.b16 %v1279
          %v1472 = vunpack.c.l.b16 %v1280
          %v1473 = vunpack.c.l.b16 %v1281
          %v1474 = vunpack.c.l.b16 %v1282
          %v1475 = vunpack.c.l.b16 %v1283
          %v1476 = vunpack.c.l.b16 %v1284
          %v1477 = vunpack.c.l.b16 %v1285
          %v1478 = vunpack.c.l.b16 %v1286
          %v1479 = vunpack.c.l.b16 %v1287
          %v1480 = vunpack.c.l.b16 %v1288
          %v1481 = vunpack.c.l.b16 %v1289
          %v1482 = vunpack.c.l.b16 %v1290
          %v1483 = vunpack.c.l.b16 %v1291
          %v1484 = vunpack.c.l.b16 %v1292
          %v1485 = vunpack.c.l.b16 %v1293
          %v1486 = vunpack.c.l.b16 %v1294
          %v1487 = vunpack.c.l.b16 %v1295
          %v1488 = vunpack.c.l.b16 %v1296
          %v1489 = vunpack.c.l.b16 %v1297
          %v1490 = vunpack.c.l.b16 %v1298
          %v1491 = vunpack.c.l.b16 %v1299
          %v1492 = vunpack.c.l.b16 %v1300
          %v1493 = vunpack.c.l.b16 %v1301
          %v1494 = vpack.c.b16 %v1471, %v1470
          %v1495 = vpack.c.b16 %v1473, %v1472
          %v1496 = vpack.c.b16 %v1475, %v1474
          %v1497 = vpack.c.b16 %v1477, %v1476
          %v1498 = vpack.c.b16 %v1479, %v1478
          %v1499 = vpack.c.b16 %v1481, %v1480
          %v1500 = vpack.c.b16 %v1483, %v1482
          %v1501 = vpack.c.b16 %v1485, %v1484
          %v1502 = vpack.c.b16 %v1487, %v1486
          %v1503 = vpack.c.b16 %v1489, %v1488
          %v1504 = vpack.c.b16 %v1491, %v1490
          %v1505 = vpack.c.b16 %v1493, %v1492
          %v1507 = vsel %vm564, %v1494, 0
          %v1510 = vsel %vm564, %v1495, 0
          %v1513 = vsel %vm564, %v1496, 0
          %v1516 = vsel %vm564, %v1497, 0
          %v1519 = vsel %vm564, %v1498, 0
          %v1522 = vsel %vm564, %v1499, 0
          %v1525 = vsel %vm564, %v1500, 0
          %v1528 = vsel %vm564, %v1501, 0
          %v1531 = vsel %vm564, %v1502, 0
          %v1534 = vsel %vm564, %v1503, 0
          %v1537 = vsel %vm564, %v1504, 0
          %v1540 = vsel %vm564, %v1505, 0
          %1542 = vmatprep.subr.bf16.mxu0 0
          %1543 = vmatpush1.bf16.msra.mxu0 %v1274
          %1544 = vmatprep.subr.bf16.mxu0 0
          %1545 = vmatpush1.bf16.msra.mxu0 %v1275
          %1546 = vmatprep.subr.bf16.mxu0 0
          %1547 = vmatpush1.bf16.msra.mxu0 %v1276
          %1548 = vmatprep.subr.bf16.mxu0 0
          %1549 = vmatpush1.bf16.msra.mxu0 %v1277
          %1550 = vmatprep.subr.bf16.mxu0 0
          %1551 = vmatpush1.bf16.msra.mxu0 0
          %1552 = vmatprep.subr.bf16.mxu0 0
          %1553 = vmatpush1.bf16.msra.mxu0 0
          %1554 = vmatprep.subr.bf16.mxu0 0
          %1555 = vmatpush1.bf16.msra.mxu0 0
          %1556 = vmatprep.subr.bf16.mxu0 0
          %1557 = vmatpush1.bf16.msra.mxu0 0
          %1558 = vmatprep.subr.bf16.mxu0 0
          %1559 = vmatpush1.bf16.msra.mxu0 0
          %1560 = vmatprep.subr.bf16.mxu0 0
          %1561 = vmatpush1.bf16.msra.mxu0 0
          %1562 = vmatprep.subr.bf16.mxu0 0
          %1563 = vmatpush1.bf16.msra.mxu0 0
          %1564 = vmatprep.subr.bf16.mxu0 0
          %1565 = vmatpush1.bf16.msra.mxu0 0
          %1566 = vmatprep.subr.bf16.mxu0 0
          %1567 = vmatpush1.bf16.msra.mxu0 0
          %1568 = vmatprep.subr.bf16.mxu0 0
          %1569 = vmatpush1.bf16.msra.mxu0 0
          %1570 = vmatprep.subr.bf16.mxu0 0
          %1571 = vmatpush1.bf16.msra.mxu0 0
          %1572 = vmatprep.subr.bf16.mxu0 0
          %1573 = vmatpush1.bf16.msra.mxu0 0
          %1574 = vmatprep.mubr.bf16.mxu0 0
          %1575 = vmatmul.mubr.bf16.gmra.mrb[0].mxu0 %v1507
          %v1576 = vpop.f32.mrb[0].mxu0
          %v1577 = vadd.f32 %v1329, %v1576
          %v1578 = vpop.f32.mrb[0].mxu0
          %v1579 = vpop.f32.mrb[0].mxu0
          %v1580 = vadd.f32 %v1334, %v1579
          %v1581 = vpop.f32.mrb[0].mxu0
          %1582 = vmatprep.mubr.bf16.mxu0 0
          %1583 = vmatmul.mubr.bf16.gmra.mrb[0].mxu0 %v1510
          %v1584 = vpop.f32.mrb[0].mxu0
          %v1585 = vadd.f32 %v1339, %v1584
          %v1586 = vpop.f32.mrb[0].mxu0
          %v1587 = vpop.f32.mrb[0].mxu0
          %v1588 = vadd.f32 %v1344, %v1587
          %v1589 = vpop.f32.mrb[0].mxu0
          %1590 = vmatprep.mubr.bf16.mxu0 0
          %1591 = vmatmul.mubr.bf16.gmra.mrb[0].mxu0 %v1513
          %v1592 = vpop.f32.mrb[0].mxu0
          %v1593 = vadd.f32 %v1349, %v1592
          %v1594 = vpop.f32.mrb[0].mxu0
          %v1595 = vpop.f32.mrb[0].mxu0
          %v1596 = vadd.f32 %v1354, %v1595
          %v1597 = vpop.f32.mrb[0].mxu0
          %1598 = vmatprep.mubr.bf16.mxu0 0
          %1599 = vmatmul.mubr.bf16.gmra.mrb[0].mxu0 %v1516
          %v1600 = vpop.f32.mrb[0].mxu0
          %v1601 = vadd.f32 %v1359, %v1600
          %v1602 = vpop.f32.mrb[0].mxu0
          %v1603 = vpop.f32.mrb[0].mxu0
          %v1604 = vadd.f32 %v1364, %v1603
          %v1605 = vpop.f32.mrb[0].mxu0
          %1606 = vmatprep.mubr.bf16.mxu0 0
          %1607 = vmatmul.mubr.bf16.gmra.mrb[0].mxu0 %v1519
          %v1608 = vpop.f32.mrb[0].mxu0
          %v1609 = vadd.f32 %v1369, %v1608
          %v1610 = vpop.f32.mrb[0].mxu0
          %v1611 = vpop.f32.mrb[0].mxu0
          %v1612 = vadd.f32 %v1374, %v1611
          %v1613 = vpop.f32.mrb[0].mxu0
          %1614 = vmatprep.mubr.bf16.mxu0 0
          %1615 = vmatmul.mubr.bf16.gmra.mrb[0].mxu0 %v1522
          %v1616 = vpop.f32.mrb[0].mxu0
          %v1617 = vadd.f32 %v1379, %v1616
          %v1618 = vpop.f32.mrb[0].mxu0
          %v1619 = vpop.f32.mrb[0].mxu0
          %v1620 = vadd.f32 %v1384, %v1619
          %v1621 = vpop.f32.mrb[0].mxu0
          %1622 = vmatprep.mubr.bf16.mxu0 0
          %1623 = vmatmul.mubr.bf16.gmra.mrb[0].mxu0 %v1525
          %v1624 = vpop.f32.mrb[0].mxu0
          %v1625 = vadd.f32 %v1389, %v1624
          %v1626 = vpop.f32.mrb[0].mxu0
          %v1627 = vpop.f32.mrb[0].mxu0
          %v1628 = vadd.f32 %v1394, %v1627
          %v1629 = vpop.f32.mrb[0].mxu0
          %1630 = vmatprep.mubr.bf16.mxu0 0
          %1631 = vmatmul.mubr.bf16.gmra.mrb[0].mxu0 %v1528
          %v1632 = vpop.f32.mrb[0].mxu0
          %v1633 = vadd.f32 %v1399, %v1632
          %v1634 = vpop.f32.mrb[0].mxu0
          %v1635 = vpop.f32.mrb[0].mxu0
          %v1636 = vadd.f32 %v1404, %v1635
          %v1637 = vpop.f32.mrb[0].mxu0
          %1638 = vmatprep.mubr.bf16.mxu0 0
          %1639 = vmatmul.mubr.bf16.gmra.mrb[0].mxu0 %v1531
          %v1640 = vpop.f32.mrb[0].mxu0
          %v1641 = vadd.f32 %v1409, %v1640
          %v1642 = vpop.f32.mrb[0].mxu0
          %v1643 = vpop.f32.mrb[0].mxu0
          %v1644 = vadd.f32 %v1414, %v1643
          %v1645 = vpop.f32.mrb[0].mxu0
          %1646 = vmatprep.mubr.bf16.mxu0 0
          %1647 = vmatmul.mubr.bf16.gmra.mrb[0].mxu0 %v1534
          %v1648 = vpop.f32.mrb[0].mxu0
          %v1649 = vadd.f32 %v1419, %v1648
          %v1650 = vpop.f32.mrb[0].mxu0
          %v1651 = vpop.f32.mrb[0].mxu0
          %v1652 = vadd.f32 %v1424, %v1651
          %v1653 = vpop.f32.mrb[0].mxu0
          %1654 = vmatprep.mubr.bf16.mxu0 0
          %1655 = vmatmul.mubr.bf16.gmra.mrb[0].mxu0 %v1537
          %v1656 = vpop.f32.mrb[0].mxu0
          %v1657 = vadd.f32 %v1429, %v1656
          %v1658 = vpop.f32.mrb[0].mxu0
          %v1659 = vpop.f32.mrb[0].mxu0
          %v1660 = vadd.f32 %v1434, %v1659
          %v1661 = vpop.f32.mrb[0].mxu0
          %1662 = vmatprep.mubr.bf16.mxu0 0
          %1663 = vmatmul.mubr.bf16.gmra.mrb[0].mxu0 %v1540
          %v1664 = vpop.f32.mrb[0].mxu0
          %v1665 = vadd.f32 %v1439, %v1664
          %v1666 = vpop.f32.mrb[0].mxu0
          %v1667 = vpop.f32.mrb[0].mxu0
          %v1668 = vadd.f32 %v1444, %v1667
          %v1669 = vpop.f32.mrb[0].mxu0
          %1670 = vdwg.mxu0
          %1671 = vxpose.xlu0.b32.start [1/16] %v1577, 128
          %1672 = vxpose.xlu0.b32.cont [2/16] %v1580, 128
          %1673 = vxpose.xlu0.b32.cont [3/16] %v1585, 128
          %1674 = vxpose.xlu0.b32.cont [4/16] %v1588, 128
          %1675 = vxpose.xlu0.b32.cont [5/16] %v1593, 128
          %1676 = vxpose.xlu0.b32.cont [6/16] %v1596, 128
          %1677 = vxpose.xlu0.b32.cont [7/16] %v1601, 128
          %1678 = vxpose.xlu0.b32.cont [8/16] %v1604, 128
          %1679 = vxpose.xlu0.b32.cont [9/16] 0.0, 128
          %1680 = vxpose.xlu0.b32.cont [10/16] 0.0, 128
          %1681 = vxpose.xlu0.b32.cont [11/16] 0.0, 128
          %1682 = vxpose.xlu0.b32.cont [12/16] 0.0, 128
          %1683 = vxpose.xlu0.b32.cont [13/16] 0.0, 128
          %1684 = vxpose.xlu0.b32.cont [14/16] 0.0, 128
          %1685 = vxpose.xlu0.b32.cont [15/16] 0.0, 128
          %1686 = vxpose.xlu0.b32.end [16/16] 0.0, 128
          %v1687 = vpop.trf.xlu0
          %v1688 = vpop.trf.xlu0
          %v1689 = vpop.trf.xlu0
          %v1690 = vpop.trf.xlu0
          %v1691 = vpop.trf.xlu0
          %v1692 = vpop.trf.xlu0
          %v1693 = vpop.trf.xlu0
          %v1694 = vpop.trf.xlu0
          %v1695 = vpop.trf.xlu0
          %v1696 = vpop.trf.xlu0
          %v1697 = vpop.trf.xlu0
          %v1698 = vpop.trf.xlu0
          %v1699 = vpop.trf.xlu0
          %v1700 = vpop.trf.xlu0
          %v1701 = vpop.trf.xlu0
          %v1702 = vpop.trf.xlu0
          %v1703 = vpack.c.bf16 %v1688, %v1687
          %v1704 = vpack.c.bf16 %v1690, %v1689
          %v1705 = vpack.c.bf16 %v1692, %v1691
          %v1706 = vpack.c.bf16 %v1694, %v1693
          %1707 = vst.msk [vmem:[#allocation2] sm:$0xff] %vm564, %v1703
          %1708 = vst.msk [vmem:[#allocation2 + $0x8] sm:$0xff] %vm564, %v1704
          %1709 = vst.msk [vmem:[#allocation2 + $0x10] sm:$0xff] %vm564, %v1705
          %1710 = vst.msk [vmem:[#allocation2 + $0x18] sm:$0xff] %vm564, %v1706
          %v1711 = vpack.c.bf16 %v1612, %v1609
          %v1712 = vpack.c.bf16 %v1620, %v1617
          %v1713 = vpack.c.bf16 %v1628, %v1625
          %v1714 = vpack.c.bf16 %v1636, %v1633
          %v1715 = vpack.c.bf16 %v1644, %v1641
          %v1716 = vpack.c.bf16 %v1652, %v1649
          %v1717 = vpack.c.bf16 %v1660, %v1657
          %v1718 = vpack.c.bf16 %v1668, %v1665
          %1719 = vst.msk [vmem:[#allocation3] sm:$0xff] %vm564, %v1711
          %1720 = vst.msk [vmem:[#allocation3 + $0x8] sm:$0xff] %vm564, %v1712
          %1721 = vst.msk [vmem:[#allocation3 + $0x10] sm:$0xff] %vm564, %v1713
          %1722 = vst.msk [vmem:[#allocation3 + $0x18] sm:$0xff] %vm564, %v1714
          %1723 = vst.msk [vmem:[#allocation3 + $0x20] sm:$0xff] %vm564, %v1715
          %1724 = vst.msk [vmem:[#allocation3 + $0x28] sm:$0xff] %vm564, %v1716
          %1725 = vst.msk [vmem:[#allocation3 + $0x30] sm:$0xff] %vm564, %v1717
          %1726 = vst.msk [vmem:[#allocation3 + $0x38] sm:$0xff] %vm564, %v1718
        $region104: #{tpu_custom_call.1} parent=59 // pred_fallthru
          _
        %s1727 = smul.u32 %s39, 64
        %s1728 = sshra.s32 %s1727, 4
        %s1729 = sand.u32 %s1727, 15
        %s1730 = smul.addr %s1728, 8
        %s1731 = scalar_lea.vmem [#allocation2], %s1730
        %v1732 = vld [vmem:[%s1731] sm:$0xff]
        %v1733 = vld [vmem:[%s1731 + $0x8] sm:$0xff]
        %v1734 = vld [vmem:[%s1731 + $0x10] sm:$0xff]
        %v1735 = vld [vmem:[%s1731 + $0x18] sm:$0xff]
        %v1736 = vld [vmem:[#allocation3] sm:$0xff]
        %v1737 = vld [vmem:[#allocation3 + $0x8] sm:$0xff]
        %v1738 = vld [vmem:[#allocation3 + $0x10] sm:$0xff]
        %v1739 = vld [vmem:[#allocation3 + $0x18] sm:$0xff]
        %v1740 = vld [vmem:[#allocation3 + $0x20] sm:$0xff]
        %v1741 = vld [vmem:[#allocation3 + $0x28] sm:$0xff]
        %v1742 = vld [vmem:[#allocation3 + $0x30] sm:$0xff]
        %v1743 = vld [vmem:[#allocation3 + $0x38] sm:$0xff]
        %vm1744 = vcmask 523264
        %v1746 = vsel %vm1744, %v1732, 0
        %v1749 = vsel %vm1744, %v1733, 0
        %v1752 = vsel %vm1744, %v1734, 0
        %v1755 = vsel %vm1744, %v1735, 0
        %1757 = vmatprep.subr.bf16.mxu0 0
        %1758 = vmatpush1.bf16.msra.mxu0 %v1736
        %1759 = vmatprep.subr.bf16.mxu0 0
        %1760 = vmatpush1.bf16.msra.mxu0 %v1737
        %1761 = vmatprep.subr.bf16.mxu0 0
        %1762 = vmatpush1.bf16.msra.mxu0 %v1738
        %1763 = vmatprep.subr.bf16.mxu0 0
        %1764 = vmatpush1.bf16.msra.mxu0 %v1739
        %1765 = vmatprep.subr.bf16.mxu0 0
        %1766 = vmatpush1.bf16.msra.mxu0 0
        %1767 = vmatprep.subr.bf16.mxu0 0
        %1768 = vmatpush1.bf16.msra.mxu0 0
        %1769 = vmatprep.subr.bf16.mxu0 0
        %1770 = vmatpush1.bf16.msra.mxu0 0
        %1771 = vmatprep.subr.bf16.mxu0 0
        %1772 = vmatpush1.bf16.msra.mxu0 0
        %1773 = vmatprep.subr.bf16.mxu0 0
        %1774 = vmatpush1.bf16.msra.mxu0 0
        %1775 = vmatprep.subr.bf16.mxu0 0
        %1776 = vmatpush1.bf16.msra.mxu0 0
        %1777 = vmatprep.subr.bf16.mxu0 0
        %1778 = vmatpush1.bf16.msra.mxu0 0
        %1779 = vmatprep.subr.bf16.mxu0 0
        %1780 = vmatpush1.bf16.msra.mxu0 0
        %1781 = vmatprep.subr.bf16.mxu0 0
        %1782 = vmatpush1.bf16.msra.mxu0 0
        %1783 = vmatprep.subr.bf16.mxu0 0
        %1784 = vmatpush1.bf16.msra.mxu0 0
        %1785 = vmatprep.subr.bf16.mxu0 0
        %1786 = vmatpush1.bf16.msra.mxu0 0
        %1787 = vmatprep.subr.bf16.mxu0 0
        %1788 = vmatpush1.bf16.msra.mxu0 0
        %1789 = vmatprep.mubr.bf16.mxu0 0
        %1790 = vmatmul.mubr.bf16.gmra.mrb[0].mxu0 %v1746
        %v1791 = vpop.f32.mrb[0].mxu0
        %v1792 = vadd.f32 0.0, %v1791
        %v1793 = vpop.f32.mrb[0].mxu0
        %v1794 = vpop.f32.mrb[0].mxu0
        %v1795 = vadd.f32 0.0, %v1794
        %v1796 = vpop.f32.mrb[0].mxu0
        %1797 = vmatprep.mubr.bf16.mxu0 0
        %1798 = vmatmul.mubr.bf16.gmra.mrb[0].mxu0 %v1749
        %v1799 = vpop.f32.mrb[0].mxu0
        %v1800 = vadd.f32 0.0, %v1799
        %v1801 = vpop.f32.mrb[0].mxu0
        %v1802 = vpop.f32.mrb[0].mxu0
        %v1803 = vadd.f32 0.0, %v1802
        %v1804 = vpop.f32.mrb[0].mxu0
        %1805 = vmatprep.mubr.bf16.mxu0 0
        %1806 = vmatmul.mubr.bf16.gmra.mrb[0].mxu0 %v1752
        %v1807 = vpop.f32.mrb[0].mxu0
        %v1808 = vadd.f32 0.0, %v1807
        %v1809 = vpop.f32.mrb[0].mxu0
        %v1810 = vpop.f32.mrb[0].mxu0
        %v1811 = vadd.f32 0.0, %v1810
        %v1812 = vpop.f32.mrb[0].mxu0
        %1813 = vmatprep.mubr.bf16.mxu0 0
        %1814 = vmatmul.mubr.bf16.gmra.mrb[0].mxu0 %v1755
        %v1815 = vpop.f32.mrb[0].mxu0
        %v1816 = vadd.f32 0.0, %v1815
        %v1817 = vpop.f32.mrb[0].mxu0
        %v1818 = vpop.f32.mrb[0].mxu0
        %v1819 = vadd.f32 0.0, %v1818
        %v1820 = vpop.f32.mrb[0].mxu0
        %1821 = vdwg.mxu0
        %v1822 = vsel %vm1744, %v1792, -inf
        %1823 = vmax.xlane.f32.xlu0 %v1822
        %v1824 = vpop.xlane.xlu0 %1823
        %v1825 = vsel %vm1744, %v1795, -inf
        %1826 = vmax.xlane.f32.xlu0 %v1825
        %v1827 = vpop.xlane.xlu0 %1826
        %v1828 = vsel %vm1744, %v1800, -inf
        %1829 = vmax.xlane.f32.xlu0 %v1828
        %v1830 = vpop.xlane.xlu0 %1829
        %v1831 = vsel %vm1744, %v1803, -inf
        %1832 = vmax.xlane.f32.xlu0 %v1831
        %v1833 = vpop.xlane.xlu0 %1832
        %v1834 = vsel %vm1744, %v1808, -inf
        %1835 = vmax.xlane.f32.xlu0 %v1834
        %v1836 = vpop.xlane.xlu0 %1835
        %v1837 = vsel %vm1744, %v1811, -inf
        %1838 = vmax.xlane.f32.xlu0 %v1837
        %v1839 = vpop.xlane.xlu0 %1838
        %v1840 = vsel %vm1744, %v1816, -inf
        %1841 = vmax.xlane.f32.xlu0 %v1840
        %v1842 = vpop.xlane.xlu0 %1841
        %v1843 = vsel %vm1744, %v1819, -inf
        %1844 = vmax.xlane.f32.xlu0 %v1843
        %v1845 = vpop.xlane.xlu0 %1844
        %v1846 = vsub.f32 %v1792, %v1824
        %v1847 = vsub.f32 %v1795, %v1827
        %v1848 = vsub.f32 %v1800, %v1830
        %v1849 = vsub.f32 %v1803, %v1833
        %v1850 = vsub.f32 %v1808, %v1836
        %v1851 = vsub.f32 %v1811, %v1839
        %v1852 = vsub.f32 %v1816, %v1842
        %v1853 = vsub.f32 %v1819, %v1845
        %v1854 = vmul.f32 %v1846, 1.442695
        %v1855 = vpow.pop %v1854
        %v1856 = vmul.f32 %v1847, 1.442695
        %v1857 = vpow.pop %v1856
        %v1858 = vmul.f32 %v1848, 1.442695
        %v1859 = vpow.pop %v1858
        %v1860 = vmul.f32 %v1849, 1.442695
        %v1861 = vpow.pop %v1860
        %v1862 = vmul.f32 %v1850, 1.442695
        %v1863 = vpow.pop %v1862
        %v1864 = vmul.f32 %v1851, 1.442695
        %v1865 = vpow.pop %v1864
        %v1866 = vmul.f32 %v1852, 1.442695
        %v1867 = vpow.pop %v1866
        %v1868 = vmul.f32 %v1853, 1.442695
        %v1869 = vpow.pop %v1868
        %v1870 = vsel %vm1744, %v1855, 0.0
        %1871 = vadd.xlane.f32.xlu0 %v1870
        %v1872 = vpop.xlane.xlu0 %1871
        %v1873 = vsel %vm1744, %v1857, 0.0
        %1874 = vadd.xlane.f32.xlu0 %v1873
        %v1875 = vpop.xlane.xlu0 %1874
        %v1876 = vsel %vm1744, %v1859, 0.0
        %1877 = vadd.xlane.f32.xlu0 %v1876
        %v1878 = vpop.xlane.xlu0 %1877
        %v1879 = vsel %vm1744, %v1861, 0.0
        %1880 = vadd.xlane.f32.xlu0 %v1879
        %v1881 = vpop.xlane.xlu0 %1880
        %v1882 = vsel %vm1744, %v1863, 0.0
        %1883 = vadd.xlane.f32.xlu0 %v1882
        %v1884 = vpop.xlane.xlu0 %1883
        %v1885 = vsel %vm1744, %v1865, 0.0
        %1886 = vadd.xlane.f32.xlu0 %v1885
        %v1887 = vpop.xlane.xlu0 %1886
        %v1888 = vsel %vm1744, %v1867, 0.0
        %1889 = vadd.xlane.f32.xlu0 %v1888
        %v1890 = vpop.xlane.xlu0 %1889
        %v1891 = vsel %vm1744, %v1869, 0.0
        %1892 = vadd.xlane.f32.xlu0 %v1891
        %v1893 = vpop.xlane.xlu0 %1892
        %v1894 = vrcp.pop %v1872
        %v1895 = vrcp.pop %v1875
        %v1896 = vrcp.pop %v1878
        %v1897 = vrcp.pop %v1881
        %v1898 = vrcp.pop %v1884
        %v1899 = vrcp.pop %v1887
        %v1900 = vrcp.pop %v1890
        %v1901 = vrcp.pop %v1893
        %v1902 = vmul.f32 %v1855, %v1894
        %v1903 = vmul.f32 %v1857, %v1895
        %v1904 = vmul.f32 %v1859, %v1896
        %v1905 = vmul.f32 %v1861, %v1897
        %v1906 = vmul.f32 %v1863, %v1898
        %v1907 = vmul.f32 %v1865, %v1899
        %v1908 = vmul.f32 %v1867, %v1900
        %v1909 = vmul.f32 %v1869, %v1901
        %v1910 = vpack.c.bf16 %v1903, %v1902
        %v1911 = vpack.c.bf16 %v1905, %v1904
        %v1912 = vpack.c.bf16 %v1907, %v1906
        %v1913 = vpack.c.bf16 %v1909, %v1908
        %v1915 = vsel %vm1744, %v1740, 0
        %v1918 = vsel %vm1744, %v1741, 0
        %v1921 = vsel %vm1744, %v1742, 0
        %v1924 = vsel %vm1744, %v1743, 0
        %v1927 = vsel %vm1744, %v1910, 0
        %v1930 = vsel %vm1744, %v1911, 0
        %v1933 = vsel %vm1744, %v1912, 0
        %v1936 = vsel %vm1744, %v1913, 0
        %1938 = vmatprep.subr.bf16.mxu0 0
        %1939 = vmatpush1.bf16.xpose.msra.mxu0 %v1927
        %1940 = vmatprep.subr.bf16.mxu0 0
        %1941 = vmatpush1.bf16.xpose.msra.mxu0 %v1930
        %1942 = vmatprep.subr.bf16.mxu0 0
        %1943 = vmatpush1.bf16.xpose.msra.mxu0 %v1933
        %1944 = vmatprep.subr.bf16.mxu0 0
        %1945 = vmatpush1.bf16.xpose.msra.mxu0 %v1936
        %1946 = vmatprep.subr.bf16.mxu0 0
        %1947 = vmatpush1.bf16.xpose.msra.mxu0 0
        %1948 = vmatprep.subr.bf16.mxu0 0
        %1949 = vmatpush1.bf16.xpose.msra.mxu0 0
        %1950 = vmatprep.subr.bf16.mxu0 0
        %1951 = vmatpush1.bf16.xpose.msra.mxu0 0
        %1952 = vmatprep.subr.bf16.mxu0 0
        %1953 = vmatpush1.bf16.xpose.msra.mxu0 0
        %1954 = vmatprep.subr.bf16.mxu0 0
        %1955 = vmatpush1.bf16.xpose.msra.mxu0 0
        %1956 = vmatprep.subr.bf16.mxu0 0
        %1957 = vmatpush1.bf16.xpose.msra.mxu0 0
        %1958 = vmatprep.subr.bf16.mxu0 0
        %1959 = vmatpush1.bf16.xpose.msra.mxu0 0
        %1960 = vmatprep.subr.bf16.mxu0 0
        %1961 = vmatpush1.bf16.xpose.msra.mxu0 0
        %1962 = vmatprep.subr.bf16.mxu0 0
        %1963 = vmatpush1.bf16.xpose.msra.mxu0 0
        %1964 = vmatprep.subr.bf16.mxu0 0
        %1965 = vmatpush1.bf16.xpose.msra.mxu0 0
        %1966 = vmatprep.subr.bf16.mxu0 0
        %1967 = vmatpush1.bf16.xpose.msra.mxu0 0
        %1968 = vmatprep.subr.bf16.mxu0 0
        %1969 = vmatpush1.bf16.xpose.msra.mxu0 0
        %1970 = vmatprep.mubr.bf16.mxu0 0
        %1971 = vmatmul.mubr.bf16.gmra.mrb[0].mxu0 %v1915
        %v1972 = vpop.f32.mrb[0].mxu0
        %v1973 = vadd.f32 0.0, %v1972
        %v1974 = vpop.f32.mrb[0].mxu0
        %v1975 = vpop.f32.mrb[0].mxu0
        %v1976 = vadd.f32 0.0, %v1975
        %v1977 = vpop.f32.mrb[0].mxu0
        %1978 = vmatprep.mubr.bf16.mxu0 0
        %1979 = vmatmul.mubr.bf16.gmra.mrb[0].mxu0 %v1918
        %v1980 = vpop.f32.mrb[0].mxu0
        %v1981 = vadd.f32 0.0, %v1980
        %v1982 = vpop.f32.mrb[0].mxu0
        %v1983 = vpop.f32.mrb[0].mxu0
        %v1984 = vadd.f32 0.0, %v1983
        %v1985 = vpop.f32.mrb[0].mxu0
        %1986 = vmatprep.mubr.bf16.mxu0 0
        %1987 = vmatmul.mubr.bf16.gmra.mrb[0].mxu0 %v1921
        %v1988 = vpop.f32.mrb[0].mxu0
        %v1989 = vadd.f32 0.0, %v1988
        %v1990 = vpop.f32.mrb[0].mxu0
        %v1991 = vpop.f32.mrb[0].mxu0
        %v1992 = vadd.f32 0.0, %v1991
        %v1993 = vpop.f32.mrb[0].mxu0
        %1994 = vmatprep.mubr.bf16.mxu0 0
        %1995 = vmatmul.mubr.bf16.gmra.mrb[0].mxu0 %v1924
        %v1996 = vpop.f32.mrb[0].mxu0
        %v1997 = vadd.f32 0.0, %v1996
        %v1998 = vpop.f32.mrb[0].mxu0
        %v1999 = vpop.f32.mrb[0].mxu0
        %v2000 = vadd.f32 0.0, %v1999
        %v2001 = vpop.f32.mrb[0].mxu0
        %2002 = vdwg.mxu0
        %v2003 = vld [vmem:[#allocation18] sm:$0xf]
        %v2004 = vld [vmem:[#allocation18 + $0x4] sm:$0xf]
        %v2005 = vld [vmem:[#allocation18 + $0x8] sm:$0xf]
        %v2006 = vld [vmem:[#allocation18 + $0xc] sm:$0xf]
        %v2007 = vld [vmem:[#allocation18 + $0x10] sm:$0xf]
        %v2008 = vld [vmem:[#allocation18 + $0x14] sm:$0xf]
        %v2009 = vld [vmem:[#allocation18 + $0x18] sm:$0xf]
        %v2010 = vld [vmem:[#allocation18 + $0x1c] sm:$0xf]
        %v2011 = vpack.c.bf16 %v1976, %v1973
        %v2012 = vpack.c.bf16 %v1984, %v1981
        %v2013 = vpack.c.bf16 %v1992, %v1989
        %v2014 = vpack.c.bf16 %v2000, %v1997
        %v2015 = vld [vmem:[#allocation19] sm:$0xff]
        %v2016 = vld [vmem:[#allocation19 + $0x8] sm:$0xff]
        %v2017 = vld [vmem:[#allocation19 + $0x10] sm:$0xff]
        %v2018 = vld [vmem:[#allocation19 + $0x18] sm:$0xff]
        %v2019 = vld [vmem:[#allocation19 + $0x20] sm:$0xff]
        %v2020 = vld [vmem:[#allocation19 + $0x28] sm:$0xff]
        %v2021 = vld [vmem:[#allocation19 + $0x30] sm:$0xff]
        %v2022 = vld [vmem:[#allocation19 + $0x38] sm:$0xff]
        %2024 = vset.pattern.permute.xlu0 0
        %2025 = vperm.xlu0 %2024, %v2015
        %v2026 = vpop.permute.xlu0 %2025
        %2029 = vset.pattern.permute.xlu0 0
        %2030 = vperm.xlu0 %2029, %v2016
        %v2031 = vpop.permute.xlu0 %2030
        %2034 = vset.pattern.permute.xlu0 0
        %2035 = vperm.xlu0 %2034, %v2017
        %v2036 = vpop.permute.xlu0 %2035
        %2039 = vset.pattern.permute.xlu0 0
        %2040 = vperm.xlu0 %2039, %v2018
        %v2041 = vpop.permute.xlu0 %2040
        %2044 = vset.pattern.permute.xlu0 0
        %2045 = vperm.xlu0 %2044, %v2019
        %v2046 = vpop.permute.xlu0 %2045
        %2049 = vset.pattern.permute.xlu0 0
        %2050 = vperm.xlu0 %2049, %v2020
        %v2051 = vpop.permute.xlu0 %2050
        %2054 = vset.pattern.permute.xlu0 0
        %2055 = vperm.xlu0 %2054, %v2021
        %v2056 = vpop.permute.xlu0 %2055
        %2059 = vset.pattern.permute.xlu0 0
        %2060 = vperm.xlu0 %2059, %v2022
        %v2061 = vpop.permute.xlu0 %2060
        %v2071 = vunpack.c.l.b16 %v2003
        %v2072 = vunpack.c.l.b16 %v2004
        %v2073 = vunpack.c.l.b16 %v2005
        %v2074 = vunpack.c.l.b16 %v2006
        %v2075 = vunpack.c.l.b16 %v2007
        %v2076 = vunpack.c.l.b16 %v2008
        %v2077 = vunpack.c.l.b16 %v2009
        %v2078 = vunpack.c.l.b16 %v2010
        %v2079 = vpack.c.b16 %v2072, %v2071
        %v2080 = vpack.c.b16 %v2074, %v2073
        %v2081 = vpack.c.b16 %v2076, %v2075
        %v2082 = vpack.c.b16 %v2078, %v2077
        %v2084 = vsel %vm1744, %v2079, 0
        %v2087 = vsel %vm1744, %v2080, 0
        %v2090 = vsel %vm1744, %v2081, 0
        %v2093 = vsel %vm1744, %v2082, 0
        %2095 = vmatprep.subr.bf16.mxu0 0
        %2096 = vmatpush1.bf16.msra.mxu0 %v2011
        %2097 = vmatprep.subr.bf16.mxu0 0
        %2098 = vmatpush1.bf16.msra.mxu0 %v2012
        %2099 = vmatprep.subr.bf16.mxu0 0
        %2100 = vmatpush1.bf16.msra.mxu0 %v2013
        %2101 = vmatprep.subr.bf16.mxu0 0
        %2102 = vmatpush1.bf16.msra.mxu0 %v2014
        %2103 = vmatprep.subr.bf16.mxu0 0
        %2104 = vmatpush1.bf16.msra.mxu0 0
        %2105 = vmatprep.subr.bf16.mxu0 0
        %2106 = vmatpush1.bf16.msra.mxu0 0
        %2107 = vmatprep.subr.bf16.mxu0 0
        %2108 = vmatpush1.bf16.msra.mxu0 0
        %2109 = vmatprep.subr.bf16.mxu0 0
        %2110 = vmatpush1.bf16.msra.mxu0 0
        %2111 = vmatprep.subr.bf16.mxu0 0
        %2112 = vmatpush1.bf16.msra.mxu0 0
        %2113 = vmatprep.subr.bf16.mxu0 0
        %2114 = vmatpush1.bf16.msra.mxu0 0
        %2115 = vmatprep.subr.bf16.mxu0 0
        %2116 = vmatpush1.bf16.msra.mxu0 0
        %2117 = vmatprep.subr.bf16.mxu0 0
        %2118 = vmatpush1.bf16.msra.mxu0 0
        %2119 = vmatprep.subr.bf16.mxu0 0
        %2120 = vmatpush1.bf16.msra.mxu0 0
        %2121 = vmatprep.subr.bf16.mxu0 0
        %2122 = vmatpush1.bf16.msra.mxu0 0
        %2123 = vmatprep.subr.bf16.mxu0 0
        %2124 = vmatpush1.bf16.msra.mxu0 0
        %2125 = vmatprep.subr.bf16.mxu0 0
        %2126 = vmatpush1.bf16.msra.mxu0 0
        %2127 = vmatprep.mubr.bf16.mxu0 0
        %2128 = vmatmul.mubr.bf16.gmra.mrb[0].mxu0 %v2084
        %v2129 = vpop.f32.mrb[0].mxu0
        %v2130 = vadd.f32 %v2026, %v2129
        %v2131 = vpop.f32.mrb[0].mxu0
        %v2132 = vpop.f32.mrb[0].mxu0
        %v2133 = vadd.f32 %v2031, %v2132
        %v2134 = vpop.f32.mrb[0].mxu0
        %2135 = vmatprep.mubr.bf16.mxu0 0
        %2136 = vmatmul.mubr.bf16.gmra.mrb[0].mxu0 %v2087
        %v2137 = vpop.f32.mrb[0].mxu0
        %v2138 = vadd.f32 %v2036, %v2137
        %v2139 = vpop.f32.mrb[0].mxu0
        %v2140 = vpop.f32.mrb[0].mxu0
        %v2141 = vadd.f32 %v2041, %v2140
        %v2142 = vpop.f32.mrb[0].mxu0
        %2143 = vmatprep.mubr.bf16.mxu0 0
        %2144 = vmatmul.mubr.bf16.gmra.mrb[0].mxu0 %v2090
        %v2145 = vpop.f32.mrb[0].mxu0
        %v2146 = vadd.f32 %v2046, %v2145
        %v2147 = vpop.f32.mrb[0].mxu0
        %v2148 = vpop.f32.mrb[0].mxu0
        %v2149 = vadd.f32 %v2051, %v2148
        %v2150 = vpop.f32.mrb[0].mxu0
        %2151 = vmatprep.mubr.bf16.mxu0 0
        %2152 = vmatmul.mubr.bf16.gmra.mrb[0].mxu0 %v2093
        %v2153 = vpop.f32.mrb[0].mxu0
        %v2154 = vadd.f32 %v2056, %v2153
        %v2155 = vpop.f32.mrb[0].mxu0
        %v2156 = vpop.f32.mrb[0].mxu0
        %v2157 = vadd.f32 %v2061, %v2156
        %v2158 = vpop.f32.mrb[0].mxu0
        %2159 = vdwg.mxu0
        %v2160 = vld [vmem:[%s477] sm:$0xff]
        %v2161 = vld [vmem:[%s477 + $0x8] sm:$0xff]
        %v2162 = vld [vmem:[%s477 + $0x10] sm:$0xff]
        %v2163 = vld [vmem:[%s477 + $0x18] sm:$0xff]
        %v2164 = vld [vmem:[%s477 + $0x20] sm:$0xff]
        %v2165 = vld [vmem:[%s477 + $0x28] sm:$0xff]
        %v2166 = vld [vmem:[%s477 + $0x30] sm:$0xff]
        %v2167 = vld [vmem:[%s477 + $0x38] sm:$0xff]
        %v2168 = vadd.f32 %v2130, %v2160
        %v2169 = vadd.f32 %v2133, %v2161
        %v2170 = vadd.f32 %v2138, %v2162
        %v2171 = vadd.f32 %v2141, %v2163
        %v2172 = vadd.f32 %v2146, %v2164
        %v2173 = vadd.f32 %v2149, %v2165
        %v2174 = vadd.f32 %v2154, %v2166
        %v2175 = vadd.f32 %v2157, %v2167
        %2176 = vst.msk [vmem:[%s550] sm:$0xff] %vm1744, %v2168
        %2177 = vst.msk [vmem:[%s550 + $0x8] sm:$0xff] %vm1744, %v2169
        %2178 = vst.msk [vmem:[%s550 + $0x10] sm:$0xff] %vm1744, %v2170
        %2179 = vst.msk [vmem:[%s550 + $0x18] sm:$0xff] %vm1744, %v2171
        %2180 = vst.msk [vmem:[%s550 + $0x20] sm:$0xff] %vm1744, %v2172
        %2181 = vst.msk [vmem:[%s550 + $0x28] sm:$0xff] %vm1744, %v2173
        %2182 = vst.msk [vmem:[%s550 + $0x30] sm:$0xff] %vm1744, %v2174
        %2183 = vst.msk [vmem:[%s550 + $0x38] sm:$0xff] %vm1744, %v2175
        %s2184 = sand.u32 %s278, 1
        %s2185 = scalar_lea.sflag [#allocation6], %s2184
        %s2186 = sand.u32 %s278, 1
        %s2187 = smul.addr %s2186, 64
        %s2188 = scalar_lea.vmem [#allocation21], %s2187
        // Predicated region
        $region105: #{tpu_custom_call.1} parent=59 // pred_check
          %p2189 = pneg %p288
        $region106: #{tpu_custom_call.1} parent=59 // pred_check_branch
          %2191 = sbr.rel (%p2189) target = $region108
        $region107: #{tpu_custom_call.1} parent=59 // pred_region
          %s2193 = ssub.s32 1024, 1024
          %2194 = vsyncadd %s2185, %s2193
          %s2195 = smul.addr %s38, 8
          %s2196 = sadd.s32 %s39, %s2195
          %s2197 = smul.addr %s2196, 128
          %s2198 = scalar_lea.hbm %s10, %s2197
          %s2199 = sshll.u32 %s2188, 4
          %s2200 = int_to_ptr.vmem [resolvable:$true] %s2199
          %2205 = dma.vmem_to_hbm [thread:$0]  %s2200, 1024, %s2198, %s2185, 128, 128, 8
        $region108: #{tpu_custom_call.1} parent=59 // pred_fallthru
          _
      $region60: #{tpu_custom_call.1} parent=5 // pred_fallthru
        _
      %p2206 = scmp.le.s32.totalorder 2, %s29
      // Predicated region
      $region109: #{tpu_custom_call.1} parent=5 // pred_check
        %p2207 = pneg %p2206
      $region110: #{tpu_custom_call.1} parent=5 // pred_check_branch
        %2209 = sbr.rel (%p2207) target = $region112
      $region111: #{tpu_custom_call.1} parent=5 // pred_region
        %s2210 = ssub.s32 %s29, 2
        // Predicated region
        $region113: #{tpu_custom_call.1} parent=111 // pred_check
          %p2211 = pneg %p294
        $region114: #{tpu_custom_call.1} parent=111 // pred_check_branch
          %2213 = sbr.rel (%p2211) target = $region116
        $region115: #{tpu_custom_call.1} parent=111 // pred_region
          %s2214 = sand.u32 %s279, 1
          %s2215 = scalar_lea.sflag [#allocation6], %s2214
          %s2216 = sand.u32 %s279, 1
          %s2217 = smul.addr %s2216, 64
          %s2218 = scalar_lea.vmem [#allocation21], %s2217
          %2219 = dma.done %s2215, 1024
        $region116: #{tpu_custom_call.1} parent=111 // pred_fallthru
          _
      $region112: #{tpu_custom_call.1} parent=5 // pred_fallthru
        _
    $region6: #{tpu_custom_call.1} parent=1 // loop_footer
      %s33 = sadd.s32 1, %s29
    $region7: #{tpu_custom_call.1} parent=1 // loop_footer_branch
      %28 = sbr.rel target = $region3
    $region8: #{tpu_custom_call.1} parent=1 // loop_exit
      _
    %2220 = vsyncpa [#allocation5], 1
    %s2221 = scalar_lea.sflag [#allocation5], 1
    %2222 = vsyncpa %s2221, 1
    %2223 = vsyncpa [#allocation8], 1
    %s2224 = scalar_lea.sflag [#allocation8], 1
    %2225 = vsyncpa %s2224, 1
    %2226 = vsyncpa [#allocation11], 1
    %2227 = vsyncpa [#allocation14], 1
    %2228 = vsyncpa [#allocation17], 1
    %2229 = vsyncpa [#allocation20], 1
    %2230 = vsyncpa [#allocation6], 1
    %s2231 = scalar_lea.sflag [#allocation6], 1
    %2232 = vsyncpa %s2231, 1

</llo_original>
